<compile_context>
chip_gen: v6e
topology: v6e:2x2x1
jax: 0.10.0
libtpu: 0.0.40
codegen_flags: <defaults>
</compile_context>

<pallas_src>
import functools

import numpy as np
import jax
import jax.numpy as jnp
from jax.experimental import pallas as pl
from jax.experimental.pallas import tpu as pltpu


def _nbytes(shape, dtype):
    return int(np.prod(shape)) * jnp.dtype(dtype).itemsize


# ----------------------------------------------------------------------------
# Fused Pallas kernel: all MPNN layers + global_mean_pool + fc in one call.
#
# Grid = (L, NT):  axis 0 = layer (sequential, "arbitrary"),
#                  axis 1 = destination-row tile (sequential, "arbitrary" because
#                  the ping-pong h scratch carries state across row tiles/layers).
# ----------------------------------------------------------------------------
def mpnn_fused_kernel(adj_ref, x_ref, bias_ref, wx0_ref, wxs_ref,
                      pool_ref, wfc_ref, bfc_ref, out_ref,
                      h_a, h_b, *, num_layers, num_row_tiles, row_tile):
    l = pl.program_id(0)                      # layer index
    i = pl.program_id(1)                      # row-tile index
    row0 = pl.multiple_of(i * row_tile, row_tile)

    def new_rows(h_full, w):
        # h_full: [N, C] previous-layer features (compute dtype), w: [C, H].
        # aggr_x = adj[rows, :] @ h   == scatter-add of gathered x_j over dst rows.
        agg = jnp.dot(adj_ref[...], h_full, preferred_element_type=jnp.float32)
        z = jnp.dot(agg.astype(w.dtype), w, preferred_element_type=jnp.float32)
        z = z + bias_ref[0]                   # precomputed h-independent edge/bias term
        # ReLU (MPNNLayer.update). The following LeakyReLU (MPNN.activation) is the
        # identity on non-negative inputs, so it is folded away.
        return jnp.maximum(z, 0.0)

    def store_rows(dst_ref, vals):
        dst_ref[pl.ds(row0, row_tile), :] = vals.astype(dst_ref.dtype)

    # ---- layer 0: reads the graph input x, writes ping-pong buffer A ----
    @pl.when(l == 0)
    def _():
        store_rows(h_a, new_rows(x_ref[...], wx0_ref[...]))

    # ---- layers >= 1: ping-pong between the two VMEM-resident h buffers ----
    if num_layers > 1:
        w_l = wxs_ref[0]                      # [H, H] (slot 0 is an unused dummy)

        @pl.when(jnp.logical_and(l > 0, (l % 2) == 1))
        def _():
            store_rows(h_b, new_rows(h_a[...], w_l))

        @pl.when(jnp.logical_and(l > 0, (l % 2) == 0))
        def _():
            store_rows(h_a, new_rows(h_b[...], w_l))

    # ---- fused global_mean_pool + fc at the very last grid step ----
    last_l = num_layers - 1
    final_buf = h_a if (last_l % 2 == 0) else h_b     # Python-level parity choice

    @pl.when(jnp.logical_and(l == last_l, i == num_row_tiles - 1))
    def _():
        h_final = final_buf[...].astype(jnp.float32)                    # [N, H]
        pooled = jnp.dot(pool_ref[...], h_final,
                         preferred_element_type=jnp.float32)            # [G, H]
        out_ref[...] = (jnp.dot(pooled, wfc_ref[...],
                                preferred_element_type=jnp.float32)
                        + bfc_ref[...])                                 # [G, 1]


def mpnn_fused_pallas(adj, x, bias, wx0, wxs, pool, wfc, bfc, *,
                      row_tile=None, compute_dtype=jnp.float32):
    N, Cin = x.shape
    L, _, H = bias.shape
    G = pool.shape[0]

    # row_tile == N keeps adj fully VMEM-resident across all layers (best for
    # moderate N); smaller row_tile streams adj row tiles (scales to large N,
    # choose per-generation: v5e/v6e default-scoped VMEM is smaller than physical,
    # v7x has only 64 MiB physical).
    if row_tile is None:
        row_tile = N
    assert N % row_tile == 0 and (row_tile % 8 == 0 or row_tile == N)
    num_row_tiles = N // row_tile

    cdt = jnp.dtype(compute_dtype)
    adj_c, x_c = adj.astype(cdt), x.astype(cdt)
    wx0_c, wxs_c = wx0.astype(cdt), wxs.astype(cdt)

    # Advisory cost estimate (matmul FLOPs + HBM bytes).
    flops, c = 0, Cin
    for _ in range(L):
        flops += 2 * N * N * c + 2 * N * c * H
        c = H
    flops += 2 * G * N * H + 2 * G * H
    adj_reads = 1 if num_row_tiles == 1 else L
    bytes_acc = (_nbytes((N, N), cdt) * adj_reads + _nbytes((N, Cin), cdt)
                 + _nbytes((L, N, H), jnp.float32) + _nbytes((L, H, H), cdt)
                 + _nbytes((Cin, H), cdt) + _nbytes((G, N), jnp.float32)
                 + _nbytes((H, 1), jnp.float32) + _nbytes((1, 1), jnp.float32)
                 + _nbytes((G, 1), jnp.float32))

    kernel = functools.partial(mpnn_fused_kernel, num_layers=L,
                               num_row_tiles=num_row_tiles, row_tile=row_tile)

    return pl.pallas_call(
        kernel,
        out_shape=jax.ShapeDtypeStruct((G, 1), jnp.float32),
        grid_spec=pltpu.PrefetchScalarGridSpec(
            num_scalar_prefetch=0,
            grid=(L, num_row_tiles),
            in_specs=[
                pl.BlockSpec((row_tile, N), lambda l, i: (i, 0)),       # adj rows
                pl.BlockSpec((N, Cin), lambda l, i: (0, 0)),            # x (resident)
                pl.BlockSpec((1, row_tile, H), lambda l, i: (l, i, 0)),  # bias_l
                pl.BlockSpec((Cin, H), lambda l, i: (0, 0)),            # wx layer 0
                pl.BlockSpec((1, H, H), lambda l, i: (l, 0, 0)),        # wx layers>=1
                pl.BlockSpec((G, N), lambda l, i: (0, 0)),              # pooling matrix
                pl.BlockSpec((H, 1), lambda l, i: (0, 0)),              # fc weight
                pl.BlockSpec((1, 1), lambda l, i: (0, 0)),              # fc bias
            ],
            out_specs=pl.BlockSpec((G, 1), lambda l, i: (0, 0)),
            scratch_shapes=[pltpu.VMEM((N, H), cdt),     # ping-pong hidden state
                            pltpu.VMEM((N, H), cdt)],
        ),
        compiler_params=pltpu.CompilerParams(
            dimension_semantics=("arbitrary", "arbitrary")),
        cost_estimate=pl.CostEstimate(flops=int(flops), transcendentals=0,
                                      bytes_accessed=int(bytes_acc)),
    )(adj_c, x_c, bias, wx0_c, wxs_c, pool, wfc, bfc)


# ----------------------------------------------------------------------------
# Full model forward: O(E) scatter densification + per-layer bias hoist (JAX glue)
# followed by the single fused Pallas kernel.
# ----------------------------------------------------------------------------
def mpnn_forward_pallas(raw_params, x, edge_index, edge_attr, batch, num_graphs,
                        *, row_tile=None, compute_dtype=jnp.float32):
    x = x.astype(jnp.float32)
    N, Cin = x.shape
    E = edge_index.shape[1]
    src, dst = edge_index[0], edge_index[1]       # PyG: row 0 = src (j), row 1 = dst (i)

    # O(E) scatter build (replaces the old [E,N] one-hots and O(N^2*E) matmul).
    ones_e = jnp.ones((E,), jnp.float32)
    adj = jax.ops.segment_sum(ones_e, dst * N + src,
                              num_segments=N * N).reshape(N, N)          # [N, N]
    agg_ea = jax.ops.segment_sum(edge_attr.reshape(-1).astype(jnp.float32),
                                 dst, num_segments=N).reshape(N, 1)      # [N, 1]
    deg = jax.ops.segment_sum(ones_e, dst, num_segments=N).reshape(N, 1)  # [N, 1]

    layers = raw_params["layers"]
    L = len(layers)
    H = layers[0]["edge_w"].shape[0]

    # Hoist the h-independent term out of the kernel hot path:
    #   bias_l = (agg_ea * w_edge_l + deg * b_edge_l) @ We_l + b_node_l
    # (edge_mlp has K=1, so a broadcast multiply replaces the degenerate matmul).
    biases = []
    wxs = [jnp.zeros((H, H), jnp.float32)]        # slot 0 unused (layer 0 uses wx0)
    wx0 = None
    for li, lp in enumerate(layers):
        in_ch = Cin if li == 0 else H
        wx = lp["node_w"][:, :in_ch].T            # [in_ch, H]
        we = lp["node_w"][:, in_ch:].T            # [H, H]
        aggr_e = (agg_ea * lp["edge_w"].reshape(1, H)
                  + deg * lp["edge_b"].reshape(1, H))                    # [N, H]
        biases.append(aggr_e @ we + lp["node_b"].reshape(1, H))          # [N, H]
        if li == 0:
            wx0 = wx
        else:
            wxs.append(wx)
    bias = jnp.stack(biases, axis=0)                                     # [L, N, H]
    wxs = jnp.stack(wxs, axis=0)                                         # [L, H, H]

    # Pre-normalized mean-pooling matrix (tiny: [N, G] / [G, N]).
    batch_oh = jax.nn.one_hot(batch, num_graphs, dtype=jnp.float32)      # [N, G]
    counts = jnp.maximum(batch_oh.sum(axis=0, keepdims=True), 1.0)       # [1, G]
    pool = (batch_oh / counts).T                                         # [G, N]

    wfc = raw_params["fc_w"].T                                           # [H, 1]
    bfc = raw_params["fc_b"].reshape(1, 1)                               # [1, 1]

    return mpnn_fused_pallas(adj, x, bias, wx0, wxs, pool, wfc, bfc,
                             row_tile=row_tile, compute_dtype=compute_dtype)


# ----------------------------------------------------------------------------
# Pure-JAX reference (mirrors the PyTorch module literally) for validation
# ----------------------------------------------------------------------------
def mpnn_forward_ref(raw_params, x, edge_index, edge_attr, batch, num_graphs):
    src, dst = edge_index[0], edge_index[1]
    ea = edge_attr.reshape(-1, 1).astype(jnp.float32)
    h = x.astype(jnp.float32)
    for lp in raw_params["layers"]:
        x_j = h[src]                                               # gather (message)
        edge_emb = ea @ lp["edge_w"].T + lp["edge_b"]              # edge_mlp
        msg = jnp.concatenate([x_j, edge_emb], axis=1)
        aggr = jax.ops.segment_sum(msg, dst, num_segments=h.shape[0])   # aggr='add'
        h = jax.nn.relu(aggr @ lp["node_w"].T + lp["node_b"])      # node_mlp + update
        h = jax.nn.leaky_relu(h, 0.01)                             # MPNN.activation
    ones = jnp.ones((h.shape[0],), jnp.float32)
    counts = jax.ops.segment_sum(ones, batch, num_segments=num_graphs)
    sums = jax.ops.segment_sum(h, batch, num_segments=num_graphs)
    pooled = sums / jnp.maximum(counts, 1.0)[:, None]              # global_mean_pool
    return pooled @ raw_params["fc_w"].T + raw_params["fc_b"]      # fc


# ----------------------------------------------------------------------------
# Deterministic parameter construction (PyTorch nn.Linear-style uniform init)
# ----------------------------------------------------------------------------
def init_params(key, input_dim, hidden_dim, num_layers):
    raw = {"layers": []}
    for i in range(num_layers):
        in_ch = input_dim if i == 0 else hidden_dim
        key, k1, k2, k3, k4 = jax.random.split(key, 5)
        be = 1.0 / np.sqrt(1.0)
        edge_w = jax.random.uniform(k1, (hidden_dim, 1), jnp.float32, -be, be)
        edge_b = jax.random.uniform(k2, (hidden_dim,), jnp.float32, -be, be)
        bn = 1.0 / np.sqrt(in_ch + hidden_dim)
        node_w = jax.random.uniform(k3, (hidden_dim, in_ch + hidden_dim),
                                    jnp.float32, -bn, bn)
        node_b = jax.random.uniform(k4, (hidden_dim,), jnp.float32, -bn, bn)
        raw["layers"].append({"edge_w": edge_w, "edge_b": edge_b,
                              "node_w": node_w, "node_b": node_b})
    key, k1, k2 = jax.random.split(key, 3)
    bf = 1.0 / np.sqrt(hidden_dim)
    raw["fc_w"] = jax.random.uniform(k1, (1, hidden_dim), jnp.float32, -bf, bf)
    raw["fc_b"] = jax.random.uniform(k2, (1,), jnp.float32, -bf, bf)
    return raw


# ----------------------------------------------------------------------------
if __name__ == "__main__":
    key = jax.random.PRNGKey(0)

    # Small synthetic graph batch: 2 graphs, 8 nodes each.
    N = 16          # total nodes
    E = 32          # total edges
    INPUT_DIM = 8
    HIDDEN_DIM = 32
    NUM_LAYERS = 2
    NUM_GRAPHS = 2

    key, kx, ks, kd, ke = jax.random.split(key, 5)
    x = jax.random.normal(kx, (N, INPUT_DIM), jnp.float32)
    # Edges stay within each graph (first 16 edges in graph 0, rest in graph 1).
    src0 = jax.random.randint(ks, (E // 2,), 0, N // 2)
    dst0 = jax.random.randint(kd, (E // 2,), 0, N // 2)
    src1 = jax.random.randint(ks, (E // 2,), N // 2, N)
    dst1 = jax.random.randint(kd, (E // 2,), N // 2, N)
    edge_index = jnp.stack([jnp.concatenate([src0, src1]),
                            jnp.concatenate([dst0, dst1])], axis=0)   # [2, E]
    edge_attr = jax.random.normal(ke, (E,), jnp.float32)              # [E]
    batch = jnp.concatenate([jnp.zeros(N // 2, jnp.int32),
                             jnp.ones(N // 2, jnp.int32)])            # [N]

    key, kparams = jax.random.split(key)
    raw_params = init_params(kparams, INPUT_DIM, HIDDEN_DIM, NUM_LAYERS)

    ref = jax.block_until_ready(
        mpnn_forward_ref(raw_params, x, edge_index, edge_attr, batch, NUM_GRAPHS))

    # 1) f32, adj fully resident (row_tile = N): exact vs reference.
    out = jax.block_until_ready(
        mpnn_forward_pallas(raw_params, x, edge_index, edge_attr, batch, NUM_GRAPHS))
    np.testing.assert_allclose(np.asarray(out), np.asarray(ref),
                               rtol=1e-4, atol=1e-4)
    assert out.shape == (NUM_GRAPHS, 1)

    # 2) f32, row-tiled path (exercises the (layer, row-tile) grid + ping-pong).
    out_tiled = jax.block_until_ready(
        mpnn_forward_pallas(raw_params, x, edge_index, edge_attr, batch, NUM_GRAPHS,
                            row_tile=8))
    np.testing.assert_allclose(np.asarray(out_tiled), np.asarray(ref),
                               rtol=1e-4, atol=1e-4)

    # 3) bf16 MXU path (v6e/v7x recommendation): loose tolerance check.
    out_bf16 = jax.block_until_ready(
        mpnn_forward_pallas(raw_params, x, edge_index, edge_attr, batch, NUM_GRAPHS,
                            compute_dtype=jnp.bfloat16))
    np.testing.assert_allclose(np.asarray(out_bf16), np.asarray(ref),
                               rtol=1e-1, atol=1e-1)

    print("KERNEL_OK")
</pallas_src>

<mosaic_0001>
module attributes {stable_mosaic.version = 11 : i64} {
  func.func @mpnn_fused_kernel(%arg0: i32, %arg1: i32, %arg2: memref<16x16xf32, #tpu.memory_space<vmem>>, %arg3: memref<16x8xf32, #tpu.memory_space<vmem>>, %arg4: memref<1x16x32xf32, #tpu.memory_space<vmem>>, %arg5: memref<8x32xf32, #tpu.memory_space<vmem>>, %arg6: memref<1x32x32xf32, #tpu.memory_space<vmem>>, %arg7: memref<2x16xf32, #tpu.memory_space<vmem>>, %arg8: memref<32x1xf32, #tpu.memory_space<vmem>>, %arg9: memref<1x1xf32, #tpu.memory_space<vmem>>, %arg10: memref<2x1xf32, #tpu.memory_space<vmem>>, %arg11: memref<16x32xf32, #tpu.memory_space<vmem>>, %arg12: memref<16x32xf32, #tpu.memory_space<vmem>>) attributes {dimension_semantics = [#tpu.dimension_semantics<arbitrary>, #tpu.dimension_semantics<arbitrary>], iteration_bounds = array<i64: 2, 1>, scalar_prefetch = 0 : i64, scratch_operands = 2 : i64, tpu.core_type = #tpu.core_type<tc>, window_params = [{transform_indices = @transform_0, window_bounds = array<i64: 16, 16>}, {pipeline_mode = #tpu.pipeline_mode<synchronous>, transform_indices = @transform_1, window_bounds = array<i64: 16, 8>}, {transform_indices = @transform_2, window_bounds = array<i64: 1, 16, 32>}, {pipeline_mode = #tpu.pipeline_mode<synchronous>, transform_indices = @transform_3, window_bounds = array<i64: 8, 32>}, {transform_indices = @transform_4, window_bounds = array<i64: 1, 32, 32>}, {pipeline_mode = #tpu.pipeline_mode<synchronous>, transform_indices = @transform_5, window_bounds = array<i64: 2, 16>}, {pipeline_mode = #tpu.pipeline_mode<synchronous>, transform_indices = @transform_6, window_bounds = array<i64: 32, 1>}, {pipeline_mode = #tpu.pipeline_mode<synchronous>, transform_indices = @transform_7, window_bounds = array<i64: 1, 1>}, {pipeline_mode = #tpu.pipeline_mode<synchronous>, transform_indices = @transform_8, window_bounds = array<i64: 2, 1>}]} {
    %c16_i32 = arith.constant 16 : i32
    %0 = arith.muli %arg1, %c16_i32 : i32
    %1 = tpu.assume_multiple %0, 16 : i32
    %c0_i32 = arith.constant 0 : i32
    %2 = arith.cmpi eq, %arg0, %c0_i32 : i32
    %3 = arith.extui %2 : i1 to i32
    %c0_i32_0 = arith.constant 0 : i32
    %4 = arith.cmpi ne, %3, %c0_i32_0 : i32
    scf.if %4 {
      %c0_22 = arith.constant 0 : index
      %c0_23 = arith.constant 0 : index
      %42 = vector.load %arg3[%c0_22, %c0_23] : memref<16x8xf32, #tpu.memory_space<vmem>>, vector<16x8xf32>
      %c0_24 = arith.constant 0 : index
      %c0_25 = arith.constant 0 : index
      %43 = vector.load %arg5[%c0_24, %c0_25] : memref<8x32xf32, #tpu.memory_space<vmem>>, vector<8x32xf32>
      %c0_26 = arith.constant 0 : index
      %c0_27 = arith.constant 0 : index
      %44 = vector.load %arg2[%c0_26, %c0_27] : memref<16x16xf32, #tpu.memory_space<vmem>>, vector<16x16xf32>
      %cst = arith.constant dense<0.000000e+00> : vector<16x8xf32>
      %45 = tpu.matmul %44, %42, %cst {dimension_numbers = #tpu.dot_dimension_numbers<[1], [0], [0], [1], [0, 0, 1, 1], [], []>} : vector<16x16xf32>, vector<16x8xf32>, vector<16x8xf32> -> vector<16x8xf32>
      %cst_28 = arith.constant dense<0.000000e+00> : vector<16x32xf32>
      %46 = tpu.matmul %45, %43, %cst_28 {dimension_numbers = #tpu.dot_dimension_numbers<[1], [0], [0], [1], [0, 0, 1, 1], [], []>} : vector<16x8xf32>, vector<8x32xf32>, vector<16x32xf32> -> vector<16x32xf32>
      %c0_29 = arith.constant 0 : index
      %c0_30 = arith.constant 0 : index
      %c0_31 = arith.constant 0 : index
      %47 = vector.load %arg4[%c0_29, %c0_30, %c0_31] : memref<1x16x32xf32, #tpu.memory_space<vmem>>, vector<1x16x32xf32>
      %48 = vector.shape_cast %47 : vector<1x16x32xf32> to vector<16x32xf32>
      %49 = arith.addf %46, %48 : vector<16x32xf32>
      %cst_32 = arith.constant 0.000000e+00 : f32
      %50 = vector.broadcast %cst_32 : f32 to vector<16x32xf32>
      %51 = arith.maximumf %49, %50 : vector<16x32xf32>
      %52 = arith.index_cast %1 : i32 to index
      %c0_33 = arith.constant 0 : index
      %53 = vector.load %arg11[%52, %c0_33] : memref<16x32xf32, #tpu.memory_space<vmem>>, vector<16x32xf32>
      tpu.vector_store %arg11[%52, %c0_33], %51 {strides = array<i32>} : memref<16x32xf32, #tpu.memory_space<vmem>>, vector<16x32xf32>,
    } else {
    }
    %c0 = arith.constant 0 : index
    %c0_1 = arith.constant 0 : index
    %c0_2 = arith.constant 0 : index
    %5 = vector.load %arg6[%c0, %c0_1, %c0_2] : memref<1x32x32xf32, #tpu.memory_space<vmem>>, vector<1x32x32xf32>
    %6 = vector.shape_cast %5 : vector<1x32x32xf32> to vector<32x32xf32>
    %c0_i32_3 = arith.constant 0 : i32
    %7 = arith.cmpi sgt, %arg0, %c0_i32_3 : i32
    %c2_i32 = arith.constant 2 : i32
    %c0_i32_4 = arith.constant 0 : i32
    %8 = arith.cmpi eq, %c2_i32, %c0_i32_4 : i32
    %c1_i32 = arith.constant 1 : i32
    %9 = arith.select %8, %c1_i32, %c2_i32 : i32
    %10 = arith.remsi %arg0, %9 : i32
    %c0_i32_5 = arith.constant 0 : i32
    %11 = arith.cmpi ne, %10, %c0_i32_5 : i32
    %c0_i32_6 = arith.constant 0 : i32
    %12 = arith.cmpi slt, %10, %c0_i32_6 : i32
    %c0_i32_7 = arith.constant 0 : i32
    %13 = arith.cmpi slt, %9, %c0_i32_7 : i32
    %14 = arith.xori %12, %13 : i1
    %15 = arith.andi %14, %11 : i1
    %16 = arith.addi %10, %9 : i32
    %17 = arith.select %15, %16, %10 : i32
    %c1_i32_8 = arith.constant 1 : i32
    %18 = arith.cmpi eq, %17, %c1_i32_8 : i32
    %19 = arith.andi %7, %18 : i1
    %20 = arith.extui %19 : i1 to i32
    %c0_i32_9 = arith.constant 0 : i32
    %21 = arith.cmpi ne, %20, %c0_i32_9 : i32
    scf.if %21 {
      %c0_22 = arith.constant 0 : index
      %c0_23 = arith.constant 0 : index
      %42 = vector.load %arg11[%c0_22, %c0_23] : memref<16x32xf32, #tpu.memory_space<vmem>>, vector<16x32xf32>
      %c0_24 = arith.constant 0 : index
      %c0_25 = arith.constant 0 : index
      %43 = vector.load %arg2[%c0_24, %c0_25] : memref<16x16xf32, #tpu.memory_space<vmem>>, vector<16x16xf32>
      %cst = arith.constant dense<0.000000e+00> : vector<16x32xf32>
      %44 = tpu.matmul %43, %42, %cst {dimension_numbers = #tpu.dot_dimension_numbers<[1], [0], [0], [1], [0, 0, 1, 1], [], []>} : vector<16x16xf32>, vector<16x32xf32>, vector<16x32xf32> -> vector<16x32xf32>
      %cst_26 = arith.constant dense<0.000000e+00> : vector<16x32xf32>
      %45 = tpu.matmul %44, %6, %cst_26 {dimension_numbers = #tpu.dot_dimension_numbers<[1], [0], [0], [1], [0, 0, 1, 1], [], []>} : vector<16x32xf32>, vector<32x32xf32>, vector<16x32xf32> -> vector<16x32xf32>
      %c0_27 = arith.constant 0 : index
      %c0_28 = arith.constant 0 : index
      %c0_29 = arith.constant 0 : index
      %46 = vector.load %arg4[%c0_27, %c0_28, %c0_29] : memref<1x16x32xf32, #tpu.memory_space<vmem>>, vector<1x16x32xf32>
      %47 = vector.shape_cast %46 : vector<1x16x32xf32> to vector<16x32xf32>
      %48 = arith.addf %45, %47 : vector<16x32xf32>
      %cst_30 = arith.constant 0.000000e+00 : f32
      %49 = vector.broadcast %cst_30 : f32 to vector<16x32xf32>
      %50 = arith.maximumf %48, %49 : vector<16x32xf32>
      %51 = arith.index_cast %1 : i32 to index
      %c0_31 = arith.constant 0 : index
      %52 = vector.load %arg12[%51, %c0_31] : memref<16x32xf32, #tpu.memory_space<vmem>>, vector<16x32xf32>
      tpu.vector_store %arg12[%51, %c0_31], %50 {strides = array<i32>} : memref<16x32xf32, #tpu.memory_space<vmem>>, vector<16x32xf32>,
    } else {
    }
    %c0_i32_10 = arith.constant 0 : i32
    %22 = arith.cmpi sgt, %arg0, %c0_i32_10 : i32
    %c2_i32_11 = arith.constant 2 : i32
    %c0_i32_12 = arith.constant 0 : i32
    %23 = arith.cmpi eq, %c2_i32_11, %c0_i32_12 : i32
    %c1_i32_13 = arith.constant 1 : i32
    %24 = arith.select %23, %c1_i32_13, %c2_i32_11 : i32
    %25 = arith.remsi %arg0, %24 : i32
    %c0_i32_14 = arith.constant 0 : i32
    %26 = arith.cmpi ne, %25, %c0_i32_14 : i32
    %c0_i32_15 = arith.constant 0 : i32
    %27 = arith.cmpi slt, %25, %c0_i32_15 : i32
    %c0_i32_16 = arith.constant 0 : i32
    %28 = arith.cmpi slt, %24, %c0_i32_16 : i32
    %29 = arith.xori %27, %28 : i1
    %30 = arith.andi %29, %26 : i1
    %31 = arith.addi %25, %24 : i32
    %32 = arith.select %30, %31, %25 : i32
    %c0_i32_17 = arith.constant 0 : i32
    %33 = arith.cmpi eq, %32, %c0_i32_17 : i32
    %34 = arith.andi %22, %33 : i1
    %35 = arith.extui %34 : i1 to i32
    %c0_i32_18 = arith.constant 0 : i32
    %36 = arith.cmpi ne, %35, %c0_i32_18 : i32
    scf.if %36 {
      %c0_22 = arith.constant 0 : index
      %c0_23 = arith.constant 0 : index
      %42 = vector.load %arg12[%c0_22, %c0_23] : memref<16x32xf32, #tpu.memory_space<vmem>>, vector<16x32xf32>
      %c0_24 = arith.constant 0 : index
      %c0_25 = arith.constant 0 : index
      %43 = vector.load %arg2[%c0_24, %c0_25] : memref<16x16xf32, #tpu.memory_space<vmem>>, vector<16x16xf32>
      %cst = arith.constant dense<0.000000e+00> : vector<16x32xf32>
      %44 = tpu.matmul %43, %42, %cst {dimension_numbers = #tpu.dot_dimension_numbers<[1], [0], [0], [1], [0, 0, 1, 1], [], []>} : vector<16x16xf32>, vector<16x32xf32>, vector<16x32xf32> -> vector<16x32xf32>
      %cst_26 = arith.constant dense<0.000000e+00> : vector<16x32xf32>
      %45 = tpu.matmul %44, %6, %cst_26 {dimension_numbers = #tpu.dot_dimension_numbers<[1], [0], [0], [1], [0, 0, 1, 1], [], []>} : vector<16x32xf32>, vector<32x32xf32>, vector<16x32xf32> -> vector<16x32xf32>
      %c0_27 = arith.constant 0 : index
      %c0_28 = arith.constant 0 : index
      %c0_29 = arith.constant 0 : index
      %46 = vector.load %arg4[%c0_27, %c0_28, %c0_29] : memref<1x16x32xf32, #tpu.memory_space<vmem>>, vector<1x16x32xf32>
      %47 = vector.shape_cast %46 : vector<1x16x32xf32> to vector<16x32xf32>
      %48 = arith.addf %45, %47 : vector<16x32xf32>
      %cst_30 = arith.constant 0.000000e+00 : f32
      %49 = vector.broadcast %cst_30 : f32 to vector<16x32xf32>
      %50 = arith.maximumf %48, %49 : vector<16x32xf32>
      %51 = arith.index_cast %1 : i32 to index
      %c0_31 = arith.constant 0 : index
      %52 = vector.load %arg11[%51, %c0_31] : memref<16x32xf32, #tpu.memory_space<vmem>>, vector<16x32xf32>
      tpu.vector_store %arg11[%51, %c0_31], %50 {strides = array<i32>} : memref<16x32xf32, #tpu.memory_space<vmem>>, vector<16x32xf32>,
    } else {
    }
    %c1_i32_19 = arith.constant 1 : i32
    %37 = arith.cmpi eq, %arg0, %c1_i32_19 : i32
    %c0_i32_20 = arith.constant 0 : i32
    %38 = arith.cmpi eq, %arg1, %c0_i32_20 : i32
    %39 = arith.andi %37, %38 : i1
    %40 = arith.extui %39 : i1 to i32
    %c0_i32_21 = arith.constant 0 : i32
    %41 = arith.cmpi ne, %40, %c0_i32_21 : i32
    scf.if %41 {
      %c0_22 = arith.constant 0 : index
      %c0_23 = arith.constant 0 : index
      %42 = vector.load %arg12[%c0_22, %c0_23] : memref<16x32xf32, #tpu.memory_space<vmem>>, vector<16x32xf32>
      %c0_24 = arith.constant 0 : index
      %c0_25 = arith.constant 0 : index
      %43 = vector.load %arg7[%c0_24, %c0_25] : memref<2x16xf32, #tpu.memory_space<vmem>>, vector<2x16xf32>
      %cst = arith.constant dense<0.000000e+00> : vector<2x32xf32>
      %44 = tpu.matmul %43, %42, %cst {dimension_numbers = #tpu.dot_dimension_numbers<[1], [0], [0], [1], [0, 0, 1, 1], [], []>} : vector<2x16xf32>, vector<16x32xf32>, vector<2x32xf32> -> vector<2x32xf32>
      %c0_26 = arith.constant 0 : index
      %c0_27 = arith.constant 0 : index
      %45 = vector.load %arg8[%c0_26, %c0_27] : memref<32x1xf32, #tpu.memory_space<vmem>>, vector<32x1xf32>
      %cst_28 = arith.constant dense<0.000000e+00> : vector<2x1xf32>
      %46 = tpu.matmul %44, %45, %cst_28 {dimension_numbers = #tpu.dot_dimension_numbers<[1], [0], [0], [1], [0, 0, 1, 1], [], []>} : vector<2x32xf32>, vector<32x1xf32>, vector<2x1xf32> -> vector<2x1xf32>
      %c0_29 = arith.constant 0 : index
      %c0_30 = arith.constant 0 : index
      %47 = vector.load %arg9[%c0_29, %c0_30] : memref<1x1xf32, #tpu.memory_space<vmem>>, vector<1x1xf32>
      %48 = vector.broadcast %47 : vector<1x1xf32> to vector<2x1xf32>
      %49 = arith.addf %46, %48 : vector<2x1xf32>
      %c0_31 = arith.constant 0 : index
      %c0_32 = arith.constant 0 : index
      %50 = vector.load %arg10[%c0_31, %c0_32] : memref<2x1xf32, #tpu.memory_space<vmem>>, vector<2x1xf32>
      tpu.vector_store %arg10[%c0_31, %c0_32], %49 {strides = array<i32>} : memref<2x1xf32, #tpu.memory_space<vmem>>, vector<2x1xf32>,
    } else {
    }
    return
  }
  func.func @transform_0(%arg0: i32, %arg1: i32) -> (i32, i32) {
    %c0_i32 = arith.constant 0 : i32
    %c0_i32_0 = arith.constant 0 : i32
    return %arg1, %c0_i32 : i32, i32
  }
  func.func @transform_1(%arg0: i32, %arg1: i32) -> (i32, i32) {
    %c0_i32 = arith.constant 0 : i32
    %c0_i32_0 = arith.constant 0 : i32
    %c0_i32_1 = arith.constant 0 : i32
    return %c0_i32, %c0_i32_0 : i32, i32
  }
  func.func @transform_2(%arg0: i32, %arg1: i32) -> (i32, i32, i32) {
    %c0_i32 = arith.constant 0 : i32
    %c0_i32_0 = arith.constant 0 : i32
    return %arg0, %arg1, %c0_i32 : i32, i32, i32
  }
  func.func @transform_3(%arg0: i32, %arg1: i32) -> (i32, i32) {
    %c0_i32 = arith.constant 0 : i32
    %c0_i32_0 = arith.constant 0 : i32
    %c0_i32_1 = arith.constant 0 : i32
    return %c0_i32, %c0_i32_0 : i32, i32
  }
  func.func @transform_4(%arg0: i32, %arg1: i32) -> (i32, i32, i32) {
    %c0_i32 = arith.constant 0 : i32
    %c0_i32_0 = arith.constant 0 : i32
    %c0_i32_1 = arith.constant 0 : i32
    return %arg0, %c0_i32, %c0_i32_0 : i32, i32, i32
  }
  func.func @transform_5(%arg0: i32, %arg1: i32) -> (i32, i32) {
    %c0_i32 = arith.constant 0 : i32
    %c0_i32_0 = arith.constant 0 : i32
    %c0_i32_1 = arith.constant 0 : i32
    return %c0_i32, %c0_i32_0 : i32, i32
  }
  func.func @transform_6(%arg0: i32, %arg1: i32) -> (i32, i32) {
    %c0_i32 = arith.constant 0 : i32
    %c0_i32_0 = arith.constant 0 : i32
    %c0_i32_1 = arith.constant 0 : i32
    return %c0_i32, %c0_i32_0 : i32, i32
  }
  func.func @transform_7(%arg0: i32, %arg1: i32) -> (i32, i32) {
    %c0_i32 = arith.constant 0 : i32
    %c0_i32_0 = arith.constant 0 : i32
    %c0_i32_1 = arith.constant 0 : i32
    return %c0_i32, %c0_i32_0 : i32, i32
  }
  func.func @transform_8(%arg0: i32, %arg1: i32) -> (i32, i32) {
    %c0_i32 = arith.constant 0 : i32
    %c0_i32_0 = arith.constant 0 : i32
    %c0_i32_1 = arith.constant 0 : i32
    return %c0_i32, %c0_i32_0 : i32, i32
  }
}

</mosaic_0001>

<llo_original>
// kernel: tpu_custom_call.1
$region0: #{tpu_custom_call.1}
  #allocation0 [shape = 'u32[]', space=smem, size = 0x4, offset = 0x4, fixed_abs, tag = 'smem constant byte address 0x4 - core index']
  #allocation1 [shape = 'u32[144,128]{1,0:T(1,128)}', space=vmem, size = 0x12000, scoped, tag = 'internal scratch']
  #allocation2 [shape = 'f32[16,32]{1,0:T(8,128)}', space=vmem, size = 0x2000, scoped, tag = 'scratch operand']
  #allocation3 [shape = 'f32[16,32]{1,0:T(8,128)}', space=vmem, size = 0x2000, scoped, tag = 'scratch operand']
  #allocation4 [shape = 'f32[1,1]{1,0:T(1,128)S(1)}', space=vmem, size = 0x200, scoped, tag = 'scoped memory for tpu_custom_call.1']
  %s0 = inlined_call_operand.hbm [shape: f32[16,16], index: 0, kind: input, shape index: {}]
  %s1 = inlined_call_operand.vmem [shape: f32[16,8], index: 1, kind: input, shape index: {}]
  %s2 = inlined_call_operand.hbm [shape: f32[2,16,32], index: 2, kind: input, shape index: {}]
  %s3 = inlined_call_operand.hbm [shape: f32[8,32], index: 3, kind: input, shape index: {}]
  %s4 = inlined_call_operand.vmem [shape: f32[2,32,32], index: 4, kind: input, shape index: {}]
  %s5 = inlined_call_operand.vmem [shape: f32[2,16], index: 5, kind: input, shape index: {}]
  %s6 = inlined_call_operand.vmem [shape: f32[32,1], index: 6, kind: input, shape index: {}]
  %s7 = inlined_call_operand.<no memory space> [shape: f32[1,1], index: 7, kind: input, shape index: {}]
  %s8 = inlined_call_operand.vmem [shape: f32[2,1], index: 8, kind: output, shape index: {}]
  %s9 = sld [smem:[#allocation0]]
  $region93: #{tpu_custom_call.1} parent=0
    _
  %s11 = ssub.s32 1, %s9
  %s12 = scalar_select 0, %s11, %s9
  %v13 = vstv %s7
  %14 = vst [vmem:[#allocation4] sm:$0x1] %v13
  $region1: #{tpu_custom_call.1} parent=0
    #allocation5 [shape = 'u8[8192]{0}', space=vmem, size = 0x2000, scoped, tag = 'input window, operand 0, single buffered']
    #allocation6 [shape = 's32[2]{0}', space=sflag, size = 0x8, scoped, tag = 'scoped memory for tpu_custom_call.1']
    #allocation7 [shape = 'u8[16384]{0}', space=vmem, size = 0x4000, scoped, tag = 'input window, operand 2']
    #allocation8 [shape = 's32[2]{0}', space=sflag, size = 0x8, scoped, tag = 'scoped memory for tpu_custom_call.1']
    #allocation9 [shape = 'u8[4096]{0}', space=vmem, size = 0x1000, scoped, tag = 'input window, operand 3, single buffered']
    %15 = vsyncpa [#allocation6], 0
    %16 = vsyncpa [#allocation8], 0
    %s17 = scalar_lea.sflag [#allocation8], 1
    %18 = vsyncpa %s17, 0
    loop: start=0, step=1, limit=4
    $region2: #{tpu_custom_call.1} parent=1 // loop_pre_header
      _
    $region3: #{tpu_custom_call.1} parent=1 // loop_header
      %s20 = sphi 0, %s24
      %p21 = scmp.ge.s32.totalorder %s20, 4
      %s27 = sphi 0, %s39
      %s28 = sphi 0, %s35
      %s29 = sphi 0, %s27
      %s30 = sphi 0, %s28
      %s31 = sphi 0, %s29
      %s32 = sphi 0, %s30
      %s42 = sphi 0, %s44
      %s45 = sphi 0, %s42
      %s46 = sphi 0, %s45
      %s62 = sphi 0, %s46
      %s66 = sphi 0, %s66
      %s68 = sphi 0, %s66
      %s69 = sphi 0, %s68
      %s83 = sphi 0, %s69
      %s91 = sphi 0, %s93
      %s94 = sphi 0, %s91
      %s95 = sphi 0, %s94
      %s111 = sphi 0, %s95
      %s115 = sphi 0, %s115
      %s117 = sphi 0, %s115
      %s118 = sphi 0, %s117
      %s132 = sphi 0, %s118
      %s138 = sphi 0, %s140
      %s141 = sphi 0, %s138
      %s142 = sphi 0, %s141
      %s158 = sphi 0, %s142
      %s162 = sphi 0, %s162
      %s164 = sphi 0, %s162
      %s165 = sphi 0, %s164
      %s179 = sphi 0, %s165
      %s183 = sphi 0, %s183
      %s185 = sphi 0, %s183
      %s186 = sphi 0, %s185
      %s200 = sphi 0, %s186
      %s204 = sphi 0, %s204
      %s206 = sphi 0, %s204
      %s207 = sphi 0, %s206
      %s221 = sphi 0, %s207
      %s225 = sphi 0, %s225
      %s227 = sphi 0, %s225
      %s228 = sphi 0, %s227
      %s242 = sphi 0, %s228
    $region4: #{tpu_custom_call.1} parent=1 // loop_header_branch
      %23 = sbr.rel (%p21) target = $region8
    $region5: #{tpu_custom_call.1} parent=1 // loop_body
      %s25 = ssub.s32 %s20, 1
      %s26 = ssub.s32 %s20, 2
      %s33 = sadd.s32 1, %s28
      %p34 = scmp.ge.s32.totalorder %s33, 1
      %s35 = scalar_select %p34, 0, %s33
      %s36 = sadd.s32 1, %s27
      %s37 = scalar_select %p34, %s36, %s27
      %p38 = scmp.ge.s32.totalorder %s37, 2
      %s39 = scalar_select %p38, 0, %s37
      %s40 = ssub.s32 %s28, %s35
      %p41 = scmp.eq.s32.totalorder %s40, 0
      %s43 = sadd.s32 %s42, 1
      %s44 = scalar_select %p41, %s42, %s43
      %p47 = pneg %p41
      %p48 = scmp.eq.s32.totalorder %s20, 1
      %p49 = por %p47, %p48
      %p50 = scmp.ne.s32.totalorder %s42, %s45
      %p51 = scmp.eq.s32.totalorder %s20, 0
      %p52 = por %p50, %p51
      %p53 = scmp.ne.s32.totalorder %s42, %s45
      %p54 = scmp.eq.s32.totalorder %s25, 1
      %p55 = por %p53, %p54
      %p56 = scmp.ne.s32.totalorder %s45, %s46
      %p57 = scmp.eq.s32.totalorder %s25, 0
      %p58 = por %p56, %p57
      %p59 = scmp.ne.s32.totalorder %s45, %s46
      %p60 = scmp.eq.s32.totalorder %s26, 1
      %p61 = por %p59, %p60
      %p63 = scmp.ne.s32.totalorder %s46, %s62
      %p64 = scmp.eq.s32.totalorder %s26, 0
      %p65 = por %p63, %p64
      %s67 = sadd.s32 %s66, 1
      %p70 = scmp.eq.s32.totalorder %s20, 1
      %p71 = scmp.ne.s32.totalorder %s66, %s68
      %p72 = scmp.eq.s32.totalorder %s20, 0
      %p73 = por %p71, %p72
      %p74 = scmp.ne.s32.totalorder %s66, %s68
      %p75 = scmp.eq.s32.totalorder %s25, 1
      %p76 = por %p74, %p75
      %p77 = scmp.ne.s32.totalorder %s68, %s69
      %p78 = scmp.eq.s32.totalorder %s25, 0
      %p79 = por %p77, %p78
      %p80 = scmp.ne.s32.totalorder %s68, %s69
      %p81 = scmp.eq.s32.totalorder %s26, 1
      %p82 = por %p80, %p81
      %p84 = scmp.ne.s32.totalorder %s69, %s83
      %p85 = scmp.eq.s32.totalorder %s26, 0
      %p86 = por %p84, %p85
      %s87 = ssub.s32 %s27, %s39
      %s88 = ssub.s32 %s28, %s35
      %s89 = sor.u32 %s87, %s88
      %p90 = scmp.eq.s32.totalorder %s89, 0
      %s92 = sadd.s32 %s91, 1
      %s93 = scalar_select %p90, %s91, %s92
      %p96 = pneg %p90
      %p97 = scmp.eq.s32.totalorder %s20, 1
      %p98 = por %p96, %p97
      %p99 = scmp.ne.s32.totalorder %s91, %s94
      %p100 = scmp.eq.s32.totalorder %s20, 0
      %p101 = por %p99, %p100
      %p102 = scmp.ne.s32.totalorder %s91, %s94
      %p103 = scmp.eq.s32.totalorder %s25, 1
      %p104 = por %p102, %p103
      %p105 = scmp.ne.s32.totalorder %s94, %s95
      %p106 = scmp.eq.s32.totalorder %s25, 0
      %p107 = por %p105, %p106
      %p108 = scmp.ne.s32.totalorder %s94, %s95
      %p109 = scmp.eq.s32.totalorder %s26, 1
      %p110 = por %p108, %p109
      %p112 = scmp.ne.s32.totalorder %s95, %s111
      %p113 = scmp.eq.s32.totalorder %s26, 0
      %p114 = por %p112, %p113
      %s116 = sadd.s32 %s115, 1
      %p119 = scmp.eq.s32.totalorder %s20, 1
      %p120 = scmp.ne.s32.totalorder %s115, %s117
      %p121 = scmp.eq.s32.totalorder %s20, 0
      %p122 = por %p120, %p121
      %p123 = scmp.ne.s32.totalorder %s115, %s117
      %p124 = scmp.eq.s32.totalorder %s25, 1
      %p125 = por %p123, %p124
      %p126 = scmp.ne.s32.totalorder %s117, %s118
      %p127 = scmp.eq.s32.totalorder %s25, 0
      %p128 = por %p126, %p127
      %p129 = scmp.ne.s32.totalorder %s117, %s118
      %p130 = scmp.eq.s32.totalorder %s26, 1
      %p131 = por %p129, %p130
      %p133 = scmp.ne.s32.totalorder %s118, %s132
      %p134 = scmp.eq.s32.totalorder %s26, 0
      %p135 = por %p133, %p134
      %s136 = ssub.s32 %s27, %s39
      %p137 = scmp.eq.s32.totalorder %s136, 0
      %s139 = sadd.s32 %s138, 1
      %s140 = scalar_select %p137, %s138, %s139
      %p143 = pneg %p137
      %p144 = scmp.eq.s32.totalorder %s20, 1
      %p145 = por %p143, %p144
      %p146 = scmp.ne.s32.totalorder %s138, %s141
      %p147 = scmp.eq.s32.totalorder %s20, 0
      %p148 = por %p146, %p147
      %p149 = scmp.ne.s32.totalorder %s138, %s141
      %p150 = scmp.eq.s32.totalorder %s25, 1
      %p151 = por %p149, %p150
      %p152 = scmp.ne.s32.totalorder %s141, %s142
      %p153 = scmp.eq.s32.totalorder %s25, 0
      %p154 = por %p152, %p153
      %p155 = scmp.ne.s32.totalorder %s141, %s142
      %p156 = scmp.eq.s32.totalorder %s26, 1
      %p157 = por %p155, %p156
      %p159 = scmp.ne.s32.totalorder %s142, %s158
      %p160 = scmp.eq.s32.totalorder %s26, 0
      %p161 = por %p159, %p160
      %s163 = sadd.s32 %s162, 1
      %p166 = scmp.eq.s32.totalorder %s20, 1
      %p167 = scmp.ne.s32.totalorder %s162, %s164
      %p168 = scmp.eq.s32.totalorder %s20, 0
      %p169 = por %p167, %p168
      %p170 = scmp.ne.s32.totalorder %s162, %s164
      %p171 = scmp.eq.s32.totalorder %s25, 1
      %p172 = por %p170, %p171
      %p173 = scmp.ne.s32.totalorder %s164, %s165
      %p174 = scmp.eq.s32.totalorder %s25, 0
      %p175 = por %p173, %p174
      %p176 = scmp.ne.s32.totalorder %s164, %s165
      %p177 = scmp.eq.s32.totalorder %s26, 1
      %p178 = por %p176, %p177
      %p180 = scmp.ne.s32.totalorder %s165, %s179
      %p181 = scmp.eq.s32.totalorder %s26, 0
      %p182 = por %p180, %p181
      %s184 = sadd.s32 %s183, 1
      %p187 = scmp.eq.s32.totalorder %s20, 1
      %p188 = scmp.ne.s32.totalorder %s183, %s185
      %p189 = scmp.eq.s32.totalorder %s20, 0
      %p190 = por %p188, %p189
      %p191 = scmp.ne.s32.totalorder %s183, %s185
      %p192 = scmp.eq.s32.totalorder %s25, 1
      %p193 = por %p191, %p192
      %p194 = scmp.ne.s32.totalorder %s185, %s186
      %p195 = scmp.eq.s32.totalorder %s25, 0
      %p196 = por %p194, %p195
      %p197 = scmp.ne.s32.totalorder %s185, %s186
      %p198 = scmp.eq.s32.totalorder %s26, 1
      %p199 = por %p197, %p198
      %p201 = scmp.ne.s32.totalorder %s186, %s200
      %p202 = scmp.eq.s32.totalorder %s26, 0
      %p203 = por %p201, %p202
      %s205 = sadd.s32 %s204, 1
      %p208 = scmp.eq.s32.totalorder %s20, 1
      %p209 = scmp.ne.s32.totalorder %s204, %s206
      %p210 = scmp.eq.s32.totalorder %s20, 0
      %p211 = por %p209, %p210
      %p212 = scmp.ne.s32.totalorder %s204, %s206
      %p213 = scmp.eq.s32.totalorder %s25, 1
      %p214 = por %p212, %p213
      %p215 = scmp.ne.s32.totalorder %s206, %s207
      %p216 = scmp.eq.s32.totalorder %s25, 0
      %p217 = por %p215, %p216
      %p218 = scmp.ne.s32.totalorder %s206, %s207
      %p219 = scmp.eq.s32.totalorder %s26, 1
      %p220 = por %p218, %p219
      %p222 = scmp.ne.s32.totalorder %s207, %s221
      %p223 = scmp.eq.s32.totalorder %s26, 0
      %p224 = por %p222, %p223
      %s226 = sadd.s32 %s225, 1
      %p229 = scmp.eq.s32.totalorder %s20, 1
      %p230 = scmp.ne.s32.totalorder %s225, %s227
      %p231 = scmp.eq.s32.totalorder %s20, 0
      %p232 = por %p230, %p231
      %p233 = scmp.ne.s32.totalorder %s225, %s227
      %p234 = scmp.eq.s32.totalorder %s25, 1
      %p235 = por %p233, %p234
      %p236 = scmp.ne.s32.totalorder %s227, %s228
      %p237 = scmp.eq.s32.totalorder %s25, 0
      %p238 = por %p236, %p237
      %p239 = scmp.ne.s32.totalorder %s227, %s228
      %p240 = scmp.eq.s32.totalorder %s26, 1
      %p241 = por %p239, %p240
      %p243 = scmp.ne.s32.totalorder %s228, %s242
      %p244 = scmp.eq.s32.totalorder %s26, 0
      %p245 = por %p243, %p244
      %p246 = scmp.le.s32.totalorder 1, %s20
      %p247 = scmp.lt.s32.totalorder %s20, 3
      %p248 = pnand %p246, %p247
      %p249 = pneg %p248
      // Predicated region
      $region9: #{tpu_custom_call.1} parent=5 // pred_check
        _
      $region10: #{tpu_custom_call.1} parent=5 // pred_check_branch
        %251 = sbr.rel (%p248) target = $region12
      $region11: #{tpu_custom_call.1} parent=5 // pred_region
        %s252 = ssub.s32 %s20, 1
        // Predicated region
        $region13: #{tpu_custom_call.1} parent=11 // pred_check
          %p253 = pneg %p58
        $region14: #{tpu_custom_call.1} parent=11 // pred_check_branch
          %255 = sbr.rel (%p253) target = $region16
        $region15: #{tpu_custom_call.1} parent=11 // pred_region
          %s256 = smul.u32 2, %s30
          %s258 = ssub.s32 256, 256
          %259 = vsyncadd [#allocation6], %s258
          %s260 = smul.addr %s256, 128
          %s261 = scalar_lea.hbm %s0, %s260
          %s262 = sshll.u32 [#allocation5], 4
          %s263 = int_to_ptr.vmem [resolvable:$true] %s262
          %268 = dma.hbm_to_vmem [thread:$0]  %s261, 256, %s263, [#allocation6], 128, 128, 8
        $region16: #{tpu_custom_call.1} parent=11 // pred_fallthru
          _
        // Predicated region
        $region17: #{tpu_custom_call.1} parent=11 // pred_check
          %p269 = pneg %p79
        $region18: #{tpu_custom_call.1} parent=11 // pred_check_branch
          %271 = sbr.rel (%p269) target = $region20
        $region19: #{tpu_custom_call.1} parent=11 // pred_region
          _
        $region20: #{tpu_custom_call.1} parent=11 // pred_fallthru
          _
        // Predicated region
        $region21: #{tpu_custom_call.1} parent=11 // pred_check
          %p272 = pneg %p128
        $region22: #{tpu_custom_call.1} parent=11 // pred_check_branch
          %274 = sbr.rel (%p272) target = $region24
        $region23: #{tpu_custom_call.1} parent=11 // pred_region
          %s276 = ssub.s32 128, 128
          %277 = vsyncadd [#allocation8], %s276
          %s279 = sshll.u32 [#allocation9], 4
          %s280 = int_to_ptr.vmem [resolvable:$true] %s279
          %282 = dma.hbm_to_vmem [thread:$0]  %s3, 128, %s280, [#allocation8]
        $region24: #{tpu_custom_call.1} parent=11 // pred_fallthru
          _
        // Predicated region
        $region25: #{tpu_custom_call.1} parent=11 // pred_check
          %p283 = pneg %p175
        $region26: #{tpu_custom_call.1} parent=11 // pred_check_branch
          %285 = sbr.rel (%p283) target = $region28
        $region27: #{tpu_custom_call.1} parent=11 // pred_region
          _
        $region28: #{tpu_custom_call.1} parent=11 // pred_fallthru
          _
        // Predicated region
        $region29: #{tpu_custom_call.1} parent=11 // pred_check
          %p286 = pneg %p196
        $region30: #{tpu_custom_call.1} parent=11 // pred_check_branch
          %288 = sbr.rel (%p286) target = $region32
        $region31: #{tpu_custom_call.1} parent=11 // pred_region
          _
        $region32: #{tpu_custom_call.1} parent=11 // pred_fallthru
          _
        // Predicated region
        $region33: #{tpu_custom_call.1} parent=11 // pred_check
          %p289 = pneg %p217
        $region34: #{tpu_custom_call.1} parent=11 // pred_check_branch
          %291 = sbr.rel (%p289) target = $region36
        $region35: #{tpu_custom_call.1} parent=11 // pred_region
          _
        $region36: #{tpu_custom_call.1} parent=11 // pred_fallthru
          _
      $region12: #{tpu_custom_call.1} parent=5 // pred_fallthru
        _
      %p292 = scmp.lt.s32.totalorder %s20, 2
      // Predicated region
      $region37: #{tpu_custom_call.1} parent=5 // pred_check
        %p293 = pneg %p292
      $region38: #{tpu_custom_call.1} parent=5 // pred_check_branch
        %295 = sbr.rel (%p293) target = $region40
      $region39: #{tpu_custom_call.1} parent=5 // pred_region
        // Predicated region
        $region41: #{tpu_custom_call.1} parent=39 // pred_check
          %p296 = pneg %p101
        $region42: #{tpu_custom_call.1} parent=39 // pred_check_branch
          %298 = sbr.rel (%p296) target = $region44
        $region43: #{tpu_custom_call.1} parent=39 // pred_region
          %s299 = sand.u32 %s20, 1
          %s300 = scalar_lea.sflag [#allocation8], %s299
          %s301 = sand.u32 %s91, 1
          %s302 = smul.addr %s301, 16
          %s303 = scalar_lea.vmem [#allocation7], %s302
          %s304 = smul.u32 2, %s28
          %s306 = ssub.s32 256, 256
          %307 = vsyncadd %s300, %s306
          %s308 = smul.addr %s27, 2
          %s309 = sadd.s32 %s304, %s308
          %s310 = smul.addr %s309, 128
          %s311 = scalar_lea.hbm %s2, %s310
          %s312 = sshll.u32 %s303, 4
          %s313 = int_to_ptr.vmem [resolvable:$true] %s312
          %318 = dma.hbm_to_vmem [thread:$0]  %s311, 256, %s313, %s300, 128, 128, 8
        $region44: #{tpu_custom_call.1} parent=39 // pred_fallthru
          _
        // Predicated region
        $region45: #{tpu_custom_call.1} parent=39 // pred_check
          %p319 = pneg %p148
        $region46: #{tpu_custom_call.1} parent=39 // pred_check_branch
          %321 = sbr.rel (%p319) target = $region48
        $region47: #{tpu_custom_call.1} parent=39 // pred_region
          %p322 = scmp.lt.s32.totalorder %s27, 1
          %s323 = scalar_select %p322, %s27, 1
          %s324 = smul.addr %s323, 4
          %s325 = smul.addr %s324, 8
          %s326 = scalar_lea.vmem %s4, %s325
        $region48: #{tpu_custom_call.1} parent=39 // pred_fallthru
          _
      $region40: #{tpu_custom_call.1} parent=5 // pred_fallthru
        _
      %p327 = scmp.le.s32.totalorder 1, %s20
      %p328 = scmp.lt.s32.totalorder %s20, 3
      %p329 = pnand %p327, %p328
      %p330 = pneg %p329
      // Predicated region
      $region49: #{tpu_custom_call.1} parent=5 // pred_check
        _
      $region50: #{tpu_custom_call.1} parent=5 // pred_check_branch
        %332 = sbr.rel (%p329) target = $region52
      $region51: #{tpu_custom_call.1} parent=5 // pred_region
        %s333 = ssub.s32 %s20, 1
        // Predicated region
        $region53: #{tpu_custom_call.1} parent=51 // pred_check
          %p334 = pneg %p58
        $region54: #{tpu_custom_call.1} parent=51 // pred_check_branch
          %336 = sbr.rel (%p334) target = $region56
        $region55: #{tpu_custom_call.1} parent=51 // pred_region
          %337 = dma.done [#allocation6], 256
        $region56: #{tpu_custom_call.1} parent=51 // pred_fallthru
          _
        %s338 = sand.u32 %s25, 1
        %s339 = scalar_lea.sflag [#allocation8], %s338
        %s340 = sand.u32 %s94, 1
        %s341 = smul.addr %s340, 16
        %s342 = scalar_lea.vmem [#allocation7], %s341
        // Predicated region
        $region57: #{tpu_custom_call.1} parent=51 // pred_check
          %p343 = pneg %p107
        $region58: #{tpu_custom_call.1} parent=51 // pred_check_branch
          %345 = sbr.rel (%p343) target = $region60
        $region59: #{tpu_custom_call.1} parent=51 // pred_region
          %346 = dma.done %s339, 256
        $region60: #{tpu_custom_call.1} parent=51 // pred_fallthru
          _
        // Predicated region
        $region61: #{tpu_custom_call.1} parent=51 // pred_check
          %p347 = pneg %p128
        $region62: #{tpu_custom_call.1} parent=51 // pred_check_branch
          %349 = sbr.rel (%p347) target = $region64
        $region63: #{tpu_custom_call.1} parent=51 // pred_region
          %350 = dma.done [#allocation8], 128
        $region64: #{tpu_custom_call.1} parent=51 // pred_fallthru
          _
        %p351 = pneg %p58
        %p352 = pneg %p55
        %p353 = pneg %p79
        %p354 = pneg %p76
        %s355 = sand.u32 %s25, 1
        %s356 = scalar_lea.sflag [#allocation8], %s355
        %s357 = sand.u32 %s94, 1
        %s358 = smul.addr %s357, 16
        %s359 = scalar_lea.vmem [#allocation7], %s358
        %p360 = pneg %p107
        %p361 = pneg %p104
        %p362 = pneg %p128
        %p363 = pneg %p125
        %p364 = scmp.lt.s32.totalorder %s29, 1
        %s365 = scalar_select %p364, %s29, 1
        %s366 = smul.addr %s365, 4
        %s367 = smul.addr %s366, 8
        %s368 = scalar_lea.vmem %s4, %s367
        %p369 = pneg %p154
        %p370 = pneg %p151
        %p371 = pneg %p175
        %p372 = pneg %p172
        %p373 = pneg %p196
        %p374 = pneg %p193
        %p375 = pneg %p217
        %p376 = pneg %p214
        %p377 = pneg %p238
        %p378 = pneg %p235
        %s379 = smul.u32 2, %s30
        %s380 = smul.u32 2, %s30
        %p381 = scmp.lt.s32.totalorder %s29, 1
        %s382 = scalar_select %p381, %s29, 1
        %s383 = smul.addr %s382, 4
        %s384 = smul.addr %s383, 8
        %s385 = scalar_lea.vmem %s4, %s384
        %s386 = smul.u32 %s30, 16
        %p387 = scmp.eq.s32.totalorder %s29, 0
        // Predicated region
        $region65: #{tpu_custom_call.1} parent=51 // pred_check
          %p388 = pneg %p387
        $region66: #{tpu_custom_call.1} parent=51 // pred_check_branch
          %390 = sbr.rel (%p388) target = $region68
        $region67: #{tpu_custom_call.1} parent=51 // pred_region
          %v391 = vld [vmem:[%s1] sm:$0xff]
          %v392 = vld [vmem:[%s1 + $0x8] sm:$0xff]
          %v393 = vld [vmem:[#allocation9] sm:$0xff]
          %v394 = vld [vmem:[#allocation5] sm:$0xff]
          %v395 = vld [vmem:[#allocation5 + $0x8] sm:$0xff]
          %vm396 = vcmask 130048
          %v398 = vsel %vm396, %v394, 0
          %v401 = vsel %vm396, %v395, 0
          %403 = vmatprep.subr.mxu0 0.0
          %404 = vmatpush1.msra.mxu0 0.0
          %405 = vmatprep.subr.mxu0 0.0
          %406 = vmatpush1.msra.mxu0 0.0
          %407 = vmatprep.subr.mxu0 0.0
          %408 = vmatpush1.msra.mxu0 0.0
          %409 = vmatprep.subr.mxu0 0.0
          %410 = vmatpush1.msra.mxu0 0.0
          %411 = vmatprep.subr.mxu0 0.0
          %412 = vmatpush1.msra.mxu0 0.0
          %413 = vmatprep.subr.mxu0 0.0
          %414 = vmatpush1.msra.mxu0 0.0
          %415 = vmatprep.subr.mxu0 0.0
          %416 = vmatpush1.msra.mxu0 0.0
          %417 = vmatprep.subr.mxu0 0.0
          %418 = vmatpush1.msra.mxu0 0.0
          %419 = vmatprep.subr.mxu0 0.0
          %420 = vmatpush1.msra.mxu0 0.0
          %421 = vmatprep.subr.mxu0 0.0
          %422 = vmatpush1.msra.mxu0 0.0
          %423 = vmatprep.subr.mxu0 0.0
          %424 = vmatpush1.msra.mxu0 0.0
          %425 = vmatprep.subr.mxu0 0.0
          %426 = vmatpush1.msra.mxu0 0.0
          %427 = vmatprep.subr.mxu0 0.0
          %428 = vmatpush1.msra.mxu0 0.0
          %429 = vmatprep.subr.mxu0 0.0
          %430 = vmatpush1.msra.mxu0 0.0
          %431 = vmatprep.subr.mxu0 0.0
          %432 = vmatpush1.msra.mxu0 %v392
          %433 = vmatprep.subr.mxu0 0.0
          %434 = vmatpush1.msra.mxu0 %v391
          %435 = vmatprep.subr.mxu0 0.0
          %436 = vmatpush2.msra.mxu0 0.0
          %437 = vmatprep.subr.mxu0 0.0
          %438 = vmatpush2.msra.mxu0 0.0
          %439 = vmatprep.subr.mxu0 0.0
          %440 = vmatpush2.msra.mxu0 0.0
          %441 = vmatprep.subr.mxu0 0.0
          %442 = vmatpush2.msra.mxu0 0.0
          %443 = vmatprep.subr.mxu0 0.0
          %444 = vmatpush2.msra.mxu0 0.0
          %445 = vmatprep.subr.mxu0 0.0
          %446 = vmatpush2.msra.mxu0 0.0
          %447 = vmatprep.subr.mxu0 0.0
          %448 = vmatpush2.msra.mxu0 0.0
          %449 = vmatprep.subr.mxu0 0.0
          %450 = vmatpush2.msra.mxu0 0.0
          %451 = vmatprep.subr.mxu0 0.0
          %452 = vmatpush2.msra.mxu0 0.0
          %453 = vmatprep.subr.mxu0 0.0
          %454 = vmatpush2.msra.mxu0 0.0
          %455 = vmatprep.subr.mxu0 0.0
          %456 = vmatpush2.msra.mxu0 0.0
          %457 = vmatprep.subr.mxu0 0.0
          %458 = vmatpush2.msra.mxu0 0.0
          %459 = vmatprep.subr.mxu0 0.0
          %460 = vmatpush2.msra.mxu0 0.0
          %461 = vmatprep.subr.mxu0 0.0
          %462 = vmatpush2.msra.mxu0 0.0
          %463 = vmatprep.subr.mxu0 0.0
          %464 = vmatpush2.msra.mxu0 0.0
          %465 = vmatprep.subr.mxu0 0.0
          %466 = vmatpush2.msra.mxu0 0.0
          %467 = vmatprep.mubr.f32.mxu0 0.0
          %468 = vmatmul.mubr.f32.gmra.mxu0 %v398
          %v469 = vpop.f32.mrf.mxu0
          %v470 = vadd.f32 0.0, %v469
          %v471 = vpop.f32.mrf.mxu0
          %472 = vmatprep.mubr.f32.mxu0 0.0
          %473 = vmatmul.mubr.f32.gmra.mxu0 %v401
          %v474 = vpop.f32.mrf.mxu0
          %v475 = vadd.f32 0.0, %v474
          %v476 = vpop.f32.mrf.mxu0
          %477 = vdwg.mxu0
          %v478 = vld [vmem:[%s342] sm:$0xff]
          %v479 = vld [vmem:[%s342 + $0x8] sm:$0xff]
          %vm480 = vcmask 64512
          %v482 = vsel %vm480, %v470, 0
          %v485 = vsel %vm480, %v475, 0
          %487 = vmatprep.subr.mxu0 0.0
          %488 = vmatpush1.msra.mxu0 0.0
          %489 = vmatprep.subr.mxu0 0.0
          %490 = vmatpush1.msra.mxu0 0.0
          %491 = vmatprep.subr.mxu0 0.0
          %492 = vmatpush1.msra.mxu0 0.0
          %493 = vmatprep.subr.mxu0 0.0
          %494 = vmatpush1.msra.mxu0 0.0
          %495 = vmatprep.subr.mxu0 0.0
          %496 = vmatpush1.msra.mxu0 0.0
          %497 = vmatprep.subr.mxu0 0.0
          %498 = vmatpush1.msra.mxu0 0.0
          %499 = vmatprep.subr.mxu0 0.0
          %500 = vmatpush1.msra.mxu0 0.0
          %501 = vmatprep.subr.mxu0 0.0
          %502 = vmatpush1.msra.mxu0 0.0
          %503 = vmatprep.subr.mxu0 0.0
          %504 = vmatpush1.msra.mxu0 0.0
          %505 = vmatprep.subr.mxu0 0.0
          %506 = vmatpush1.msra.mxu0 0.0
          %507 = vmatprep.subr.mxu0 0.0
          %508 = vmatpush1.msra.mxu0 0.0
          %509 = vmatprep.subr.mxu0 0.0
          %510 = vmatpush1.msra.mxu0 0.0
          %511 = vmatprep.subr.mxu0 0.0
          %512 = vmatpush1.msra.mxu0 0.0
          %513 = vmatprep.subr.mxu0 0.0
          %514 = vmatpush1.msra.mxu0 0.0
          %515 = vmatprep.subr.mxu0 0.0
          %516 = vmatpush1.msra.mxu0 0.0
          %517 = vmatprep.subr.mxu0 0.0
          %518 = vmatpush1.msra.mxu0 %v393
          %519 = vmatprep.subr.mxu0 0.0
          %520 = vmatpush2.msra.mxu0 0.0
          %521 = vmatprep.subr.mxu0 0.0
          %522 = vmatpush2.msra.mxu0 0.0
          %523 = vmatprep.subr.mxu0 0.0
          %524 = vmatpush2.msra.mxu0 0.0
          %525 = vmatprep.subr.mxu0 0.0
          %526 = vmatpush2.msra.mxu0 0.0
          %527 = vmatprep.subr.mxu0 0.0
          %528 = vmatpush2.msra.mxu0 0.0
          %529 = vmatprep.subr.mxu0 0.0
          %530 = vmatpush2.msra.mxu0 0.0
          %531 = vmatprep.subr.mxu0 0.0
          %532 = vmatpush2.msra.mxu0 0.0
          %533 = vmatprep.subr.mxu0 0.0
          %534 = vmatpush2.msra.mxu0 0.0
          %535 = vmatprep.subr.mxu0 0.0
          %536 = vmatpush2.msra.mxu0 0.0
          %537 = vmatprep.subr.mxu0 0.0
          %538 = vmatpush2.msra.mxu0 0.0
          %539 = vmatprep.subr.mxu0 0.0
          %540 = vmatpush2.msra.mxu0 0.0
          %541 = vmatprep.subr.mxu0 0.0
          %542 = vmatpush2.msra.mxu0 0.0
          %543 = vmatprep.subr.mxu0 0.0
          %544 = vmatpush2.msra.mxu0 0.0
          %545 = vmatprep.subr.mxu0 0.0
          %546 = vmatpush2.msra.mxu0 0.0
          %547 = vmatprep.subr.mxu0 0.0
          %548 = vmatpush2.msra.mxu0 0.0
          %549 = vmatprep.subr.mxu0 0.0
          %550 = vmatpush2.msra.mxu0 0.0
          %551 = vmatprep.mubr.f32.mxu0 0.0
          %552 = vmatmul.mubr.f32.gmra.mxu0 %v482
          %v553 = vpop.f32.mrf.mxu0
          %v554 = vadd.f32 %v478, %v553
          %v555 = vpop.f32.mrf.mxu0
          %556 = vmatprep.mubr.f32.mxu0 0.0
          %557 = vmatmul.mubr.f32.gmra.mxu0 %v485
          %v558 = vpop.f32.mrf.mxu0
          %v559 = vadd.f32 %v479, %v558
          %v560 = vpop.f32.mrf.mxu0
          %561 = vdwg.mxu0
          %v562 = vmax.f32 %v554, 0.0
          %v563 = vmax.f32 %v559, 0.0
          %s564 = scalar_lea.vmem [#allocation2], %s386
          %vm565 = vcmask 261120
          %566 = vst.msk [vmem:[%s564] sm:$0xff] %vm565, %v562
          %567 = vst.msk [vmem:[%s564 + $0x8] sm:$0xff] %vm565, %v563
        $region68: #{tpu_custom_call.1} parent=51 // pred_fallthru
          _
        %v568 = vld [vmem:[%s385] sm:$0xff]
        %v569 = vld [vmem:[%s385 + $0x8] sm:$0xff]
        %v570 = vld [vmem:[%s385 + $0x10] sm:$0xff]
        %v571 = vld [vmem:[%s385 + $0x18] sm:$0xff]
        %p572 = scmp.gt.s32.totalorder %s29, 0
        %p573 = scmp.lt.s32.totalorder %s29, 0
        %s574 = ssub.s32 0, %s29
        %s575 = scalar_select %p573, %s574, %s29
        %s576 = sand.u32 %s575, 1
        %s577 = ssub.s32 0, %s576
        %s578 = scalar_select %p573, %s577, %s576
        %p579 = scmp.ne.s32.totalorder %s578, 0
        %p580 = scmp.lt.s32.totalorder %s578, 0
        %p581 = pnand %p580, %p579
        %p582 = pneg %p581
        %s583 = sadd.s32 %s578, 2
        %s584 = scalar_select %p582, %s583, %s578
        %p585 = scmp.eq.s32.totalorder %s584, 1
        %p586 = pnand %p572, %p585
        %p587 = pneg %p586
        // Predicated region
        $region69: #{tpu_custom_call.1} parent=51 // pred_check
          _
        $region70: #{tpu_custom_call.1} parent=51 // pred_check_branch
          %589 = sbr.rel (%p586) target = $region72
        $region71: #{tpu_custom_call.1} parent=51 // pred_region
          %v590 = vld [vmem:[#allocation2] sm:$0xff]
          %v591 = vld [vmem:[#allocation2 + $0x8] sm:$0xff]
          %v592 = vld [vmem:[#allocation5] sm:$0xff]
          %v593 = vld [vmem:[#allocation5 + $0x8] sm:$0xff]
          %vm594 = vcmask 130048
          %v596 = vsel %vm594, %v592, 0
          %v599 = vsel %vm594, %v593, 0
          %601 = vmatprep.subr.mxu0 0.0
          %602 = vmatpush1.msra.mxu0 0.0
          %603 = vmatprep.subr.mxu0 0.0
          %604 = vmatpush1.msra.mxu0 0.0
          %605 = vmatprep.subr.mxu0 0.0
          %606 = vmatpush1.msra.mxu0 0.0
          %607 = vmatprep.subr.mxu0 0.0
          %608 = vmatpush1.msra.mxu0 0.0
          %609 = vmatprep.subr.mxu0 0.0
          %610 = vmatpush1.msra.mxu0 0.0
          %611 = vmatprep.subr.mxu0 0.0
          %612 = vmatpush1.msra.mxu0 0.0
          %613 = vmatprep.subr.mxu0 0.0
          %614 = vmatpush1.msra.mxu0 0.0
          %615 = vmatprep.subr.mxu0 0.0
          %616 = vmatpush1.msra.mxu0 0.0
          %617 = vmatprep.subr.mxu0 0.0
          %618 = vmatpush1.msra.mxu0 0.0
          %619 = vmatprep.subr.mxu0 0.0
          %620 = vmatpush1.msra.mxu0 0.0
          %621 = vmatprep.subr.mxu0 0.0
          %622 = vmatpush1.msra.mxu0 0.0
          %623 = vmatprep.subr.mxu0 0.0
          %624 = vmatpush1.msra.mxu0 0.0
          %625 = vmatprep.subr.mxu0 0.0
          %626 = vmatpush1.msra.mxu0 0.0
          %627 = vmatprep.subr.mxu0 0.0
          %628 = vmatpush1.msra.mxu0 0.0
          %629 = vmatprep.subr.mxu0 0.0
          %630 = vmatpush1.msra.mxu0 %v591
          %631 = vmatprep.subr.mxu0 0.0
          %632 = vmatpush1.msra.mxu0 %v590
          %633 = vmatprep.subr.mxu0 0.0
          %634 = vmatpush2.msra.mxu0 0.0
          %635 = vmatprep.subr.mxu0 0.0
          %636 = vmatpush2.msra.mxu0 0.0
          %637 = vmatprep.subr.mxu0 0.0
          %638 = vmatpush2.msra.mxu0 0.0
          %639 = vmatprep.subr.mxu0 0.0
          %640 = vmatpush2.msra.mxu0 0.0
          %641 = vmatprep.subr.mxu0 0.0
          %642 = vmatpush2.msra.mxu0 0.0
          %643 = vmatprep.subr.mxu0 0.0
          %644 = vmatpush2.msra.mxu0 0.0
          %645 = vmatprep.subr.mxu0 0.0
          %646 = vmatpush2.msra.mxu0 0.0
          %647 = vmatprep.subr.mxu0 0.0
          %648 = vmatpush2.msra.mxu0 0.0
          %649 = vmatprep.subr.mxu0 0.0
          %650 = vmatpush2.msra.mxu0 0.0
          %651 = vmatprep.subr.mxu0 0.0
          %652 = vmatpush2.msra.mxu0 0.0
          %653 = vmatprep.subr.mxu0 0.0
          %654 = vmatpush2.msra.mxu0 0.0
          %655 = vmatprep.subr.mxu0 0.0
          %656 = vmatpush2.msra.mxu0 0.0
          %657 = vmatprep.subr.mxu0 0.0
          %658 = vmatpush2.msra.mxu0 0.0
          %659 = vmatprep.subr.mxu0 0.0
          %660 = vmatpush2.msra.mxu0 0.0
          %661 = vmatprep.subr.mxu0 0.0
          %662 = vmatpush2.msra.mxu0 0.0
          %663 = vmatprep.subr.mxu0 0.0
          %664 = vmatpush2.msra.mxu0 0.0
          %665 = vmatprep.mubr.f32.mxu0 0.0
          %666 = vmatmul.mubr.f32.gmra.mxu0 %v596
          %v667 = vpop.f32.mrf.mxu0
          %v668 = vadd.f32 0.0, %v667
          %v669 = vpop.f32.mrf.mxu0
          %670 = vmatprep.mubr.f32.mxu0 0.0
          %671 = vmatmul.mubr.f32.gmra.mxu0 %v599
          %v672 = vpop.f32.mrf.mxu0
          %v673 = vadd.f32 0.0, %v672
          %v674 = vpop.f32.mrf.mxu0
          %675 = vdwg.mxu0
          %v676 = vld [vmem:[%s342] sm:$0xff]
          %v677 = vld [vmem:[%s342 + $0x8] sm:$0xff]
          %vm678 = vcmask 261120
          %v680 = vsel %vm678, %v668, 0
          %v683 = vsel %vm678, %v673, 0
          %685 = vmatprep.subr.mxu0 0.0
          %686 = vmatpush1.msra.mxu0 0.0
          %687 = vmatprep.subr.mxu0 0.0
          %688 = vmatpush1.msra.mxu0 0.0
          %689 = vmatprep.subr.mxu0 0.0
          %690 = vmatpush1.msra.mxu0 0.0
          %691 = vmatprep.subr.mxu0 0.0
          %692 = vmatpush1.msra.mxu0 0.0
          %693 = vmatprep.subr.mxu0 0.0
          %694 = vmatpush1.msra.mxu0 0.0
          %695 = vmatprep.subr.mxu0 0.0
          %696 = vmatpush1.msra.mxu0 0.0
          %697 = vmatprep.subr.mxu0 0.0
          %698 = vmatpush1.msra.mxu0 0.0
          %699 = vmatprep.subr.mxu0 0.0
          %700 = vmatpush1.msra.mxu0 0.0
          %701 = vmatprep.subr.mxu0 0.0
          %702 = vmatpush1.msra.mxu0 0.0
          %703 = vmatprep.subr.mxu0 0.0
          %704 = vmatpush1.msra.mxu0 0.0
          %705 = vmatprep.subr.mxu0 0.0
          %706 = vmatpush1.msra.mxu0 0.0
          %707 = vmatprep.subr.mxu0 0.0
          %708 = vmatpush1.msra.mxu0 0.0
          %709 = vmatprep.subr.mxu0 0.0
          %710 = vmatpush1.msra.mxu0 %v571
          %711 = vmatprep.subr.mxu0 0.0
          %712 = vmatpush1.msra.mxu0 %v570
          %713 = vmatprep.subr.mxu0 0.0
          %714 = vmatpush1.msra.mxu0 %v569
          %715 = vmatprep.subr.mxu0 0.0
          %716 = vmatpush1.msra.mxu0 %v568
          %717 = vmatprep.subr.mxu0 0.0
          %718 = vmatpush2.msra.mxu0 0.0
          %719 = vmatprep.subr.mxu0 0.0
          %720 = vmatpush2.msra.mxu0 0.0
          %721 = vmatprep.subr.mxu0 0.0
          %722 = vmatpush2.msra.mxu0 0.0
          %723 = vmatprep.subr.mxu0 0.0
          %724 = vmatpush2.msra.mxu0 0.0
          %725 = vmatprep.subr.mxu0 0.0
          %726 = vmatpush2.msra.mxu0 0.0
          %727 = vmatprep.subr.mxu0 0.0
          %728 = vmatpush2.msra.mxu0 0.0
          %729 = vmatprep.subr.mxu0 0.0
          %730 = vmatpush2.msra.mxu0 0.0
          %731 = vmatprep.subr.mxu0 0.0
          %732 = vmatpush2.msra.mxu0 0.0
          %733 = vmatprep.subr.mxu0 0.0
          %734 = vmatpush2.msra.mxu0 0.0
          %735 = vmatprep.subr.mxu0 0.0
          %736 = vmatpush2.msra.mxu0 0.0
          %737 = vmatprep.subr.mxu0 0.0
          %738 = vmatpush2.msra.mxu0 0.0
          %739 = vmatprep.subr.mxu0 0.0
          %740 = vmatpush2.msra.mxu0 0.0
          %741 = vmatprep.subr.mxu0 0.0
          %742 = vmatpush2.msra.mxu0 0.0
          %743 = vmatprep.subr.mxu0 0.0
          %744 = vmatpush2.msra.mxu0 0.0
          %745 = vmatprep.subr.mxu0 0.0
          %746 = vmatpush2.msra.mxu0 0.0
          %747 = vmatprep.subr.mxu0 0.0
          %748 = vmatpush2.msra.mxu0 0.0
          %749 = vmatprep.mubr.f32.mxu0 0.0
          %750 = vmatmul.mubr.f32.gmra.mxu0 %v680
          %v751 = vpop.f32.mrf.mxu0
          %v752 = vadd.f32 %v676, %v751
          %v753 = vpop.f32.mrf.mxu0
          %754 = vmatprep.mubr.f32.mxu0 0.0
          %755 = vmatmul.mubr.f32.gmra.mxu0 %v683
          %v756 = vpop.f32.mrf.mxu0
          %v757 = vadd.f32 %v677, %v756
          %v758 = vpop.f32.mrf.mxu0
          %759 = vdwg.mxu0
          %v760 = vmax.f32 %v752, 0.0
          %v761 = vmax.f32 %v757, 0.0
          %s762 = scalar_lea.vmem [#allocation3], %s386
          %763 = vst.msk [vmem:[%s762] sm:$0xff] %vm678, %v760
          %764 = vst.msk [vmem:[%s762 + $0x8] sm:$0xff] %vm678, %v761
        $region72: #{tpu_custom_call.1} parent=51 // pred_fallthru
          _
        %p765 = scmp.eq.s32.totalorder %s584, 0
        %p766 = pnand %p572, %p765
        %p767 = pneg %p766
        // Predicated region
        $region73: #{tpu_custom_call.1} parent=51 // pred_check
          _
        $region74: #{tpu_custom_call.1} parent=51 // pred_check_branch
          %769 = sbr.rel (%p766) target = $region76
        $region75: #{tpu_custom_call.1} parent=51 // pred_region
          %v770 = vld [vmem:[#allocation3] sm:$0xff]
          %v771 = vld [vmem:[#allocation3 + $0x8] sm:$0xff]
          %v772 = vld [vmem:[#allocation5] sm:$0xff]
          %v773 = vld [vmem:[#allocation5 + $0x8] sm:$0xff]
          %vm774 = vcmask 130048
          %v776 = vsel %vm774, %v772, 0
          %v779 = vsel %vm774, %v773, 0
          %781 = vmatprep.subr.mxu0 0.0
          %782 = vmatpush1.msra.mxu0 0.0
          %783 = vmatprep.subr.mxu0 0.0
          %784 = vmatpush1.msra.mxu0 0.0
          %785 = vmatprep.subr.mxu0 0.0
          %786 = vmatpush1.msra.mxu0 0.0
          %787 = vmatprep.subr.mxu0 0.0
          %788 = vmatpush1.msra.mxu0 0.0
          %789 = vmatprep.subr.mxu0 0.0
          %790 = vmatpush1.msra.mxu0 0.0
          %791 = vmatprep.subr.mxu0 0.0
          %792 = vmatpush1.msra.mxu0 0.0
          %793 = vmatprep.subr.mxu0 0.0
          %794 = vmatpush1.msra.mxu0 0.0
          %795 = vmatprep.subr.mxu0 0.0
          %796 = vmatpush1.msra.mxu0 0.0
          %797 = vmatprep.subr.mxu0 0.0
          %798 = vmatpush1.msra.mxu0 0.0
          %799 = vmatprep.subr.mxu0 0.0
          %800 = vmatpush1.msra.mxu0 0.0
          %801 = vmatprep.subr.mxu0 0.0
          %802 = vmatpush1.msra.mxu0 0.0
          %803 = vmatprep.subr.mxu0 0.0
          %804 = vmatpush1.msra.mxu0 0.0
          %805 = vmatprep.subr.mxu0 0.0
          %806 = vmatpush1.msra.mxu0 0.0
          %807 = vmatprep.subr.mxu0 0.0
          %808 = vmatpush1.msra.mxu0 0.0
          %809 = vmatprep.subr.mxu0 0.0
          %810 = vmatpush1.msra.mxu0 %v771
          %811 = vmatprep.subr.mxu0 0.0
          %812 = vmatpush1.msra.mxu0 %v770
          %813 = vmatprep.subr.mxu0 0.0
          %814 = vmatpush2.msra.mxu0 0.0
          %815 = vmatprep.subr.mxu0 0.0
          %816 = vmatpush2.msra.mxu0 0.0
          %817 = vmatprep.subr.mxu0 0.0
          %818 = vmatpush2.msra.mxu0 0.0
          %819 = vmatprep.subr.mxu0 0.0
          %820 = vmatpush2.msra.mxu0 0.0
          %821 = vmatprep.subr.mxu0 0.0
          %822 = vmatpush2.msra.mxu0 0.0
          %823 = vmatprep.subr.mxu0 0.0
          %824 = vmatpush2.msra.mxu0 0.0
          %825 = vmatprep.subr.mxu0 0.0
          %826 = vmatpush2.msra.mxu0 0.0
          %827 = vmatprep.subr.mxu0 0.0
          %828 = vmatpush2.msra.mxu0 0.0
          %829 = vmatprep.subr.mxu0 0.0
          %830 = vmatpush2.msra.mxu0 0.0
          %831 = vmatprep.subr.mxu0 0.0
          %832 = vmatpush2.msra.mxu0 0.0
          %833 = vmatprep.subr.mxu0 0.0
          %834 = vmatpush2.msra.mxu0 0.0
          %835 = vmatprep.subr.mxu0 0.0
          %836 = vmatpush2.msra.mxu0 0.0
          %837 = vmatprep.subr.mxu0 0.0
          %838 = vmatpush2.msra.mxu0 0.0
          %839 = vmatprep.subr.mxu0 0.0
          %840 = vmatpush2.msra.mxu0 0.0
          %841 = vmatprep.subr.mxu0 0.0
          %842 = vmatpush2.msra.mxu0 0.0
          %843 = vmatprep.subr.mxu0 0.0
          %844 = vmatpush2.msra.mxu0 0.0
          %845 = vmatprep.mubr.f32.mxu0 0.0
          %846 = vmatmul.mubr.f32.gmra.mxu0 %v776
          %v847 = vpop.f32.mrf.mxu0
          %v848 = vadd.f32 0.0, %v847
          %v849 = vpop.f32.mrf.mxu0
          %850 = vmatprep.mubr.f32.mxu0 0.0
          %851 = vmatmul.mubr.f32.gmra.mxu0 %v779
          %v852 = vpop.f32.mrf.mxu0
          %v853 = vadd.f32 0.0, %v852
          %v854 = vpop.f32.mrf.mxu0
          %855 = vdwg.mxu0
          %v856 = vld [vmem:[%s342] sm:$0xff]
          %v857 = vld [vmem:[%s342 + $0x8] sm:$0xff]
          %vm858 = vcmask 261120
          %v860 = vsel %vm858, %v848, 0
          %v863 = vsel %vm858, %v853, 0
          %865 = vmatprep.subr.mxu0 0.0
          %866 = vmatpush1.msra.mxu0 0.0
          %867 = vmatprep.subr.mxu0 0.0
          %868 = vmatpush1.msra.mxu0 0.0
          %869 = vmatprep.subr.mxu0 0.0
          %870 = vmatpush1.msra.mxu0 0.0
          %871 = vmatprep.subr.mxu0 0.0
          %872 = vmatpush1.msra.mxu0 0.0
          %873 = vmatprep.subr.mxu0 0.0
          %874 = vmatpush1.msra.mxu0 0.0
          %875 = vmatprep.subr.mxu0 0.0
          %876 = vmatpush1.msra.mxu0 0.0
          %877 = vmatprep.subr.mxu0 0.0
          %878 = vmatpush1.msra.mxu0 0.0
          %879 = vmatprep.subr.mxu0 0.0
          %880 = vmatpush1.msra.mxu0 0.0
          %881 = vmatprep.subr.mxu0 0.0
          %882 = vmatpush1.msra.mxu0 0.0
          %883 = vmatprep.subr.mxu0 0.0
          %884 = vmatpush1.msra.mxu0 0.0
          %885 = vmatprep.subr.mxu0 0.0
          %886 = vmatpush1.msra.mxu0 0.0
          %887 = vmatprep.subr.mxu0 0.0
          %888 = vmatpush1.msra.mxu0 0.0
          %889 = vmatprep.subr.mxu0 0.0
          %890 = vmatpush1.msra.mxu0 %v571
          %891 = vmatprep.subr.mxu0 0.0
          %892 = vmatpush1.msra.mxu0 %v570
          %893 = vmatprep.subr.mxu0 0.0
          %894 = vmatpush1.msra.mxu0 %v569
          %895 = vmatprep.subr.mxu0 0.0
          %896 = vmatpush1.msra.mxu0 %v568
          %897 = vmatprep.subr.mxu0 0.0
          %898 = vmatpush2.msra.mxu0 0.0
          %899 = vmatprep.subr.mxu0 0.0
          %900 = vmatpush2.msra.mxu0 0.0
          %901 = vmatprep.subr.mxu0 0.0
          %902 = vmatpush2.msra.mxu0 0.0
          %903 = vmatprep.subr.mxu0 0.0
          %904 = vmatpush2.msra.mxu0 0.0
          %905 = vmatprep.subr.mxu0 0.0
          %906 = vmatpush2.msra.mxu0 0.0
          %907 = vmatprep.subr.mxu0 0.0
          %908 = vmatpush2.msra.mxu0 0.0
          %909 = vmatprep.subr.mxu0 0.0
          %910 = vmatpush2.msra.mxu0 0.0
          %911 = vmatprep.subr.mxu0 0.0
          %912 = vmatpush2.msra.mxu0 0.0
          %913 = vmatprep.subr.mxu0 0.0
          %914 = vmatpush2.msra.mxu0 0.0
          %915 = vmatprep.subr.mxu0 0.0
          %916 = vmatpush2.msra.mxu0 0.0
          %917 = vmatprep.subr.mxu0 0.0
          %918 = vmatpush2.msra.mxu0 0.0
          %919 = vmatprep.subr.mxu0 0.0
          %920 = vmatpush2.msra.mxu0 0.0
          %921 = vmatprep.subr.mxu0 0.0
          %922 = vmatpush2.msra.mxu0 0.0
          %923 = vmatprep.subr.mxu0 0.0
          %924 = vmatpush2.msra.mxu0 0.0
          %925 = vmatprep.subr.mxu0 0.0
          %926 = vmatpush2.msra.mxu0 0.0
          %927 = vmatprep.subr.mxu0 0.0
          %928 = vmatpush2.msra.mxu0 0.0
          %929 = vmatprep.mubr.f32.mxu0 0.0
          %930 = vmatmul.mubr.f32.gmra.mxu0 %v860
          %v931 = vpop.f32.mrf.mxu0
          %v932 = vadd.f32 %v856, %v931
          %v933 = vpop.f32.mrf.mxu0
          %934 = vmatprep.mubr.f32.mxu0 0.0
          %935 = vmatmul.mubr.f32.gmra.mxu0 %v863
          %v936 = vpop.f32.mrf.mxu0
          %v937 = vadd.f32 %v857, %v936
          %v938 = vpop.f32.mrf.mxu0
          %939 = vdwg.mxu0
          %v940 = vmax.f32 %v932, 0.0
          %v941 = vmax.f32 %v937, 0.0
          %s942 = scalar_lea.vmem [#allocation2], %s386
          %943 = vst.msk [vmem:[%s942] sm:$0xff] %vm858, %v940
          %944 = vst.msk [vmem:[%s942 + $0x8] sm:$0xff] %vm858, %v941
        $region76: #{tpu_custom_call.1} parent=51 // pred_fallthru
          _
        %p945 = scmp.eq.s32.totalorder %s29, 1
        %p946 = scmp.eq.s32.totalorder %s30, 0
        %p947 = pnand %p945, %p946
        %p948 = pneg %p947
        // Predicated region
        $region77: #{tpu_custom_call.1} parent=51 // pred_check
          _
        $region78: #{tpu_custom_call.1} parent=51 // pred_check_branch
          %950 = sbr.rel (%p947) target = $region80
        $region79: #{tpu_custom_call.1} parent=51 // pred_region
          %v951 = vld [vmem:[#allocation3] sm:$0xff]
          %v952 = vld [vmem:[#allocation3 + $0x8] sm:$0xff]
          %v953 = vld [vmem:[%s5] sm:$0x3]
          %vm954 = vcmask 130048
          %v956 = vsel %vm954, %v953, 0
          %958 = vmatprep.subr.mxu0 0.0
          %959 = vmatpush1.msra.mxu0 0.0
          %960 = vmatprep.subr.mxu0 0.0
          %961 = vmatpush1.msra.mxu0 0.0
          %962 = vmatprep.subr.mxu0 0.0
          %963 = vmatpush1.msra.mxu0 0.0
          %964 = vmatprep.subr.mxu0 0.0
          %965 = vmatpush1.msra.mxu0 0.0
          %966 = vmatprep.subr.mxu0 0.0
          %967 = vmatpush1.msra.mxu0 0.0
          %968 = vmatprep.subr.mxu0 0.0
          %969 = vmatpush1.msra.mxu0 0.0
          %970 = vmatprep.subr.mxu0 0.0
          %971 = vmatpush1.msra.mxu0 0.0
          %972 = vmatprep.subr.mxu0 0.0
          %973 = vmatpush1.msra.mxu0 0.0
          %974 = vmatprep.subr.mxu0 0.0
          %975 = vmatpush1.msra.mxu0 0.0
          %976 = vmatprep.subr.mxu0 0.0
          %977 = vmatpush1.msra.mxu0 0.0
          %978 = vmatprep.subr.mxu0 0.0
          %979 = vmatpush1.msra.mxu0 0.0
          %980 = vmatprep.subr.mxu0 0.0
          %981 = vmatpush1.msra.mxu0 0.0
          %982 = vmatprep.subr.mxu0 0.0
          %983 = vmatpush1.msra.mxu0 0.0
          %984 = vmatprep.subr.mxu0 0.0
          %985 = vmatpush1.msra.mxu0 0.0
          %986 = vmatprep.subr.mxu0 0.0
          %987 = vmatpush1.msra.mxu0 %v952
          %988 = vmatprep.subr.mxu0 0.0
          %989 = vmatpush1.msra.mxu0 %v951
          %990 = vmatprep.subr.mxu0 0.0
          %991 = vmatpush2.msra.mxu0 0.0
          %992 = vmatprep.subr.mxu0 0.0
          %993 = vmatpush2.msra.mxu0 0.0
          %994 = vmatprep.subr.mxu0 0.0
          %995 = vmatpush2.msra.mxu0 0.0
          %996 = vmatprep.subr.mxu0 0.0
          %997 = vmatpush2.msra.mxu0 0.0
          %998 = vmatprep.subr.mxu0 0.0
          %999 = vmatpush2.msra.mxu0 0.0
          %1000 = vmatprep.subr.mxu0 0.0
          %1001 = vmatpush2.msra.mxu0 0.0
          %1002 = vmatprep.subr.mxu0 0.0
          %1003 = vmatpush2.msra.mxu0 0.0
          %1004 = vmatprep.subr.mxu0 0.0
          %1005 = vmatpush2.msra.mxu0 0.0
          %1006 = vmatprep.subr.mxu0 0.0
          %1007 = vmatpush2.msra.mxu0 0.0
          %1008 = vmatprep.subr.mxu0 0.0
          %1009 = vmatpush2.msra.mxu0 0.0
          %1010 = vmatprep.subr.mxu0 0.0
          %1011 = vmatpush2.msra.mxu0 0.0
          %1012 = vmatprep.subr.mxu0 0.0
          %1013 = vmatpush2.msra.mxu0 0.0
          %1014 = vmatprep.subr.mxu0 0.0
          %1015 = vmatpush2.msra.mxu0 0.0
          %1016 = vmatprep.subr.mxu0 0.0
          %1017 = vmatpush2.msra.mxu0 0.0
          %1018 = vmatprep.subr.mxu0 0.0
          %1019 = vmatpush2.msra.mxu0 0.0
          %1020 = vmatprep.subr.mxu0 0.0
          %1021 = vmatpush2.msra.mxu0 0.0
          %1022 = vmatprep.mubr.f32.mxu0 0.0
          %1023 = vmatmul.mubr.f32.gmra.mxu0 %v956
          %v1024 = vpop.f32.mrf.mxu0
          %v1025 = vadd.f32 0.0, %v1024
          %v1026 = vpop.f32.mrf.mxu0
          %1027 = vdwg.mxu0
          %v1028 = vld [vmem:[%s6] sm:$0xff]
          %v1029 = vld [vmem:[%s6 + $0x8] sm:$0xff]
          %v1030 = vld [vmem:[%s6 + $0x10] sm:$0xff]
          %v1031 = vld [vmem:[%s6 + $0x18] sm:$0xff]
          %v1032 = vld [vmem:[#allocation4] sm:$0x1]
          %v1034 = vlaneseq
          %v1035 = vshrl.u32 %v1034, 7
          %v1036 = vsub.s32 0, %v1035
          %v1037 = vrot.slane %v1032, %v1036
          %vm1039 = vcmask 261120
          %v1041 = vsel %vm1039, %v1025, 0
          %1043 = vmatprep.subr.mxu0 0.0
          %1044 = vmatpush1.msra.mxu0 0.0
          %1045 = vmatprep.subr.mxu0 0.0
          %1046 = vmatpush1.msra.mxu0 0.0
          %1047 = vmatprep.subr.mxu0 0.0
          %1048 = vmatpush1.msra.mxu0 0.0
          %1049 = vmatprep.subr.mxu0 0.0
          %1050 = vmatpush1.msra.mxu0 0.0
          %1051 = vmatprep.subr.mxu0 0.0
          %1052 = vmatpush1.msra.mxu0 0.0
          %1053 = vmatprep.subr.mxu0 0.0
          %1054 = vmatpush1.msra.mxu0 0.0
          %1055 = vmatprep.subr.mxu0 0.0
          %1056 = vmatpush1.msra.mxu0 0.0
          %1057 = vmatprep.subr.mxu0 0.0
          %1058 = vmatpush1.msra.mxu0 0.0
          %1059 = vmatprep.subr.mxu0 0.0
          %1060 = vmatpush1.msra.mxu0 0.0
          %1061 = vmatprep.subr.mxu0 0.0
          %1062 = vmatpush1.msra.mxu0 0.0
          %1063 = vmatprep.subr.mxu0 0.0
          %1064 = vmatpush1.msra.mxu0 0.0
          %1065 = vmatprep.subr.mxu0 0.0
          %1066 = vmatpush1.msra.mxu0 0.0
          %1067 = vmatprep.subr.mxu0 0.0
          %1068 = vmatpush1.msra.mxu0 %v1031
          %1069 = vmatprep.subr.mxu0 0.0
          %1070 = vmatpush1.msra.mxu0 %v1030
          %1071 = vmatprep.subr.mxu0 0.0
          %1072 = vmatpush1.msra.mxu0 %v1029
          %1073 = vmatprep.subr.mxu0 0.0
          %1074 = vmatpush1.msra.mxu0 %v1028
          %1075 = vmatprep.subr.mxu0 0.0
          %1076 = vmatpush2.msra.mxu0 0.0
          %1077 = vmatprep.subr.mxu0 0.0
          %1078 = vmatpush2.msra.mxu0 0.0
          %1079 = vmatprep.subr.mxu0 0.0
          %1080 = vmatpush2.msra.mxu0 0.0
          %1081 = vmatprep.subr.mxu0 0.0
          %1082 = vmatpush2.msra.mxu0 0.0
          %1083 = vmatprep.subr.mxu0 0.0
          %1084 = vmatpush2.msra.mxu0 0.0
          %1085 = vmatprep.subr.mxu0 0.0
          %1086 = vmatpush2.msra.mxu0 0.0
          %1087 = vmatprep.subr.mxu0 0.0
          %1088 = vmatpush2.msra.mxu0 0.0
          %1089 = vmatprep.subr.mxu0 0.0
          %1090 = vmatpush2.msra.mxu0 0.0
          %1091 = vmatprep.subr.mxu0 0.0
          %1092 = vmatpush2.msra.mxu0 0.0
          %1093 = vmatprep.subr.mxu0 0.0
          %1094 = vmatpush2.msra.mxu0 0.0
          %1095 = vmatprep.subr.mxu0 0.0
          %1096 = vmatpush2.msra.mxu0 0.0
          %1097 = vmatprep.subr.mxu0 0.0
          %1098 = vmatpush2.msra.mxu0 0.0
          %1099 = vmatprep.subr.mxu0 0.0
          %1100 = vmatpush2.msra.mxu0 0.0
          %1101 = vmatprep.subr.mxu0 0.0
          %1102 = vmatpush2.msra.mxu0 0.0
          %1103 = vmatprep.subr.mxu0 0.0
          %1104 = vmatpush2.msra.mxu0 0.0
          %1105 = vmatprep.subr.mxu0 0.0
          %1106 = vmatpush2.msra.mxu0 0.0
          %1107 = vmatprep.mubr.f32.mxu0 0.0
          %1108 = vmatmul.mubr.f32.gmra.mxu0 %v1041
          %v1109 = vpop.f32.mrf.mxu0
          %v1110 = vadd.f32 %v1037, %v1109
          %v1111 = vpop.f32.mrf.mxu0
          %1112 = vdwg.mxu0
          %vm1113 = vcmask 1024
          %1114 = vst.msk [vmem:[%s8] sm:$0x3] %vm1113, %v1110
        $region80: #{tpu_custom_call.1} parent=51 // pred_fallthru
          _
        // Predicated region
        $region81: #{tpu_custom_call.1} parent=51 // pred_check
          %p1115 = pneg %p235
        $region82: #{tpu_custom_call.1} parent=51 // pred_check_branch
          %1117 = sbr.rel (%p1115) target = $region84
        $region83: #{tpu_custom_call.1} parent=51 // pred_region
          _
        $region84: #{tpu_custom_call.1} parent=51 // pred_fallthru
          _
        // Predicated region
        $region85: #{tpu_custom_call.1} parent=51 // pred_check
          %p1118 = pneg %p235
        $region86: #{tpu_custom_call.1} parent=51 // pred_check_branch
          %1120 = sbr.rel (%p1118) target = $region88
        $region87: #{tpu_custom_call.1} parent=51 // pred_region
          _
        $region88: #{tpu_custom_call.1} parent=51 // pred_fallthru
          _
      $region52: #{tpu_custom_call.1} parent=5 // pred_fallthru
        _
      %p1121 = scmp.le.s32.totalorder 2, %s20
      // Predicated region
      $region89: #{tpu_custom_call.1} parent=5 // pred_check
        %p1122 = pneg %p1121
      $region90: #{tpu_custom_call.1} parent=5 // pred_check_branch
        %1124 = sbr.rel (%p1122) target = $region92
      $region91: #{tpu_custom_call.1} parent=5 // pred_region
        %s1125 = ssub.s32 %s20, 2
      $region92: #{tpu_custom_call.1} parent=5 // pred_fallthru
        _
    $region6: #{tpu_custom_call.1} parent=1 // loop_footer
      %s24 = sadd.s32 1, %s20
    $region7: #{tpu_custom_call.1} parent=1 // loop_footer_branch
      %19 = sbr.rel target = $region3
    $region8: #{tpu_custom_call.1} parent=1 // loop_exit
      _
    %1126 = vsyncpa [#allocation6], 1
    %s1127 = scalar_lea.sflag [#allocation6], 1
    %1128 = vsyncpa %s1127, 1
    %1129 = vsyncpa [#allocation8], 1
    %s1130 = scalar_lea.sflag [#allocation8], 1
    %1131 = vsyncpa %s1130, 1

</llo_original>
